<compile_context>
chip_gen: v5e
topology: v5e:2x2
jax: 0.10.0
libtpu: 0.0.40
codegen_flags: <defaults>
</compile_context>

<pallas_src>
import jax
import jax.numpy as jnp
from jax.experimental import pallas as pl
from jax.experimental.pallas import tpu as pltpu


# ------------------------------ Fused kernel ---------------------------------

def _make_fused_kernel(num_layers, seq, pad_batch, batch, hidden_size, vocab,
                       has_hidden):
    """Kernel: [x_flat, wih0, w_comb, b_pack, wlin, blin, (h0, c0)?]
               -> (out, hn, cn) with one (P, seq, H) VMEM scratch."""
    L, P, H, V = num_layers, pad_batch, hidden_size, vocab
    G = 4 * H

    def kernel(*refs):
        x_ref, wih0_ref, wcomb_ref, bpack_ref, wlin_ref, blin_ref = refs[:6]
        idx = 6
        if has_hidden:
            h0_ref, c0_ref = refs[idx], refs[idx + 1]
            idx += 2
        out_ref, hn_ref, cn_ref = refs[idx], refs[idx + 1], refs[idx + 2]
        y_ref = refs[idx + 3]                         # (P, seq, H) f32 scratch

        wcomb = wcomb_ref[...]                        # (L*H, L*G) bf16
        bpack = bpack_ref[...]                        # (1, L*G)  f32

        # Hoisted layer-0 input projection: one MXU matmul off the serial path.
        gx0 = jnp.dot(x_ref[...], wih0_ref[...],
                      preferred_element_type=jnp.float32)        # (seq*P, G) f32

        if has_hidden:
            h = [h0_ref[l] for l in range(L)]
            c = [c0_ref[l] for l in range(L)]
        else:
            h = [jnp.zeros((P, H), jnp.float32) for _ in range(L)]
            c = [jnp.zeros((P, H), jnp.float32) for _ in range(L)]

        def cell(gates, c_prev):
            # PyTorch gate order [i, f, g, o]; one sigmoid + one tanh over the
            # full (P, 4H) block, lane-sliced afterwards (3 EUP pushes total).
            sg = jax.nn.sigmoid(gates)
            th = jnp.tanh(gates)
            i_g = sg[:, 0 * H:1 * H]
            f_g = sg[:, 1 * H:2 * H]
            o_g = sg[:, 3 * H:4 * H]
            g_g = th[:, 2 * H:3 * H]
            c_new = f_g * c_prev + i_g * g_g
            h_new = o_g * jnp.tanh(c_new)
            return h_new, c_new

        # Wavefront recurrence: one fused recurrent matmul per wavefront.
        # rec block l = h[l] @ Whh_l (+ h[l-1] @ Wih_l for l >= 1) + b_l.
        for s in range(seq + L - 1):
            if s == 0 and not has_hidden:
                rec = jnp.broadcast_to(bpack, (P, L * G))         # h == 0
            else:
                h_cat = jnp.concatenate(h, axis=1).astype(jnp.bfloat16)
                rec = jnp.dot(h_cat, wcomb,
                              preferred_element_type=jnp.float32) + bpack
            for l in range(L):
                t = s - l
                if 0 <= t < seq:
                    gates = rec[:, l * G:(l + 1) * G]
                    if l == 0:
                        gates = gates + gx0[t * P:(t + 1) * P, :]
                    h_new, c_new = cell(gates, c[l])
                    h[l], c[l] = h_new, c_new
                    if l == L - 1:
                        # Batch-major scratch store; hides under MXU latency.
                        y_ref[:, t, :] = h_new

        # Epilogue: single head matmul over the real batch rows, one dense store.
        y = y_ref[...].reshape(P * seq, H)[:batch * seq, :]
        logits = (jnp.dot(y.astype(jnp.bfloat16), wlin_ref[...],
                          preferred_element_type=jnp.float32)
                  + blin_ref[...])                                # (batch*seq, V)
        out_ref[...] = logits.reshape(batch, seq, V)
        for l in range(L):
            hn_ref[l] = h[l][:batch, :]
            cn_ref[l] = c[l][:batch, :]

    return kernel


# ------------------------------ Model wrapper --------------------------------

def init_params(key, vocab, hidden, num_layers):
    """Deterministic init mirroring PyTorch shapes (uniform +-1/sqrt(H))."""
    k = 1.0 / float(hidden) ** 0.5
    params = {"lstm": []}
    for layer in range(num_layers):
        in_size = vocab if layer == 0 else hidden
        key, k1, k2, k3, k4 = jax.random.split(key, 5)
        w_ih = jax.random.uniform(k1, (4 * hidden, in_size), jnp.float32, -k, k)
        w_hh = jax.random.uniform(k2, (4 * hidden, hidden), jnp.float32, -k, k)
        b_ih = jax.random.uniform(k3, (4 * hidden,), jnp.float32, -k, k)
        b_hh = jax.random.uniform(k4, (4 * hidden,), jnp.float32, -k, k)
        params["lstm"].append(dict(w_ih_t=w_ih.T, w_hh_t=w_hh.T,
                                   b=(b_ih + b_hh)[None, :]))
    key, k5, k6 = jax.random.split(key, 3)
    w_lin = jax.random.uniform(k5, (vocab, hidden), jnp.float32, -k, k)
    b_lin = jax.random.uniform(k6, (vocab,), jnp.float32, -k, k)
    params["linear"] = dict(w_t=w_lin.T, b=b_lin[None, :])
    return params


def text_generation_forward(params, x, hidden=None):
    """Equivalent of TextGenerationModel.forward(x, hidden) — one pallas_call."""
    seq, batch, vocab = x.shape
    L = len(params["lstm"])
    H = params["lstm"][0]["w_hh_t"].shape[0]
    G = 4 * H
    P = ((batch + 7) // 8) * 8                       # pad batch to sublane count

    # Flatten + pad + bf16-cast the input on the wrapper side (free collapse).
    x_p = x if batch == P else jnp.pad(x, ((0, 0), (0, P - batch), (0, 0)))
    x_flat = x_p.reshape(seq * P, vocab).astype(jnp.bfloat16)

    # Fused block-upper-triangular recurrent weight and packed biases.
    w_comb = jnp.zeros((L * H, L * G), jnp.float32)
    bs = []
    for l, p in enumerate(params["lstm"]):
        w_comb = w_comb.at[l * H:(l + 1) * H, l * G:(l + 1) * G].set(p["w_hh_t"])
        if l >= 1:
            w_comb = w_comb.at[(l - 1) * H:l * H, l * G:(l + 1) * G].set(p["w_ih_t"])
        bs.append(p["b"])
    w_comb = w_comb.astype(jnp.bfloat16)
    b_pack = jnp.concatenate(bs, axis=1)                          # (1, L*G) f32
    wih0_t = params["lstm"][0]["w_ih_t"].astype(jnp.bfloat16)     # (vocab, G)
    wlin_t = params["linear"]["w_t"].astype(jnp.bfloat16)         # (H, vocab)
    blin = params["linear"]["b"]                                  # (1, vocab)

    args = [x_flat, wih0_t, w_comb, b_pack, wlin_t, blin]
    has_hidden = hidden is not None
    if has_hidden:
        h0, c0 = hidden
        if batch != P:
            h0 = jnp.pad(h0, ((0, 0), (0, P - batch), (0, 0)))
            c0 = jnp.pad(c0, ((0, 0), (0, P - batch), (0, 0)))
        args += [h0, c0]

    vmem = pl.BlockSpec(memory_space=pltpu.MemorySpace.VMEM)
    out, hn, cn = pl.pallas_call(
        _make_fused_kernel(L, seq, P, batch, H, vocab, has_hidden),
        out_shape=(jax.ShapeDtypeStruct((batch, seq, vocab), jnp.float32),
                   jax.ShapeDtypeStruct((L, batch, H), jnp.float32),
                   jax.ShapeDtypeStruct((L, batch, H), jnp.float32)),
        in_specs=[vmem] * len(args),
        out_specs=(vmem, vmem, vmem),
        scratch_shapes=[pltpu.VMEM((P, seq, H), jnp.float32)],
    )(*args)
    return out, (hn, cn)


# ------------------------------ Pure-JAX reference ---------------------------

def _reference_forward(params, x, hidden=None):
    seq, batch, _ = x.shape
    num_layers = len(params["lstm"])
    H = params["lstm"][0]["w_hh_t"].shape[0]
    if hidden is None:
        h0 = jnp.zeros((num_layers, batch, H), jnp.float32)
        c0 = jnp.zeros((num_layers, batch, H), jnp.float32)
    else:
        h0, c0 = hidden
    layer_in = x
    hs, cs = [], []
    for layer in range(num_layers):
        p = params["lstm"][layer]
        h, c = h0[layer], c0[layer]
        outs = []
        for t in range(seq):
            gates = layer_in[t] @ p["w_ih_t"] + h @ p["w_hh_t"] + p["b"]
            i_g = jax.nn.sigmoid(gates[:, 0 * H:1 * H])
            f_g = jax.nn.sigmoid(gates[:, 1 * H:2 * H])
            g_g = jnp.tanh(gates[:, 2 * H:3 * H])
            o_g = jax.nn.sigmoid(gates[:, 3 * H:4 * H])
            c = f_g * c + i_g * g_g
            h = o_g * jnp.tanh(c)
            outs.append(h)
        layer_in = jnp.stack(outs)
        hs.append(h)
        cs.append(c)
    out = jnp.transpose(layer_in, (1, 0, 2)) @ params["linear"]["w_t"] \
        + params["linear"]["b"]
    return out, (jnp.stack(hs), jnp.stack(cs))


# ----------------------------------- Main ------------------------------------

if __name__ == "__main__":
    BATCH, SEQ, VOCAB, HIDDEN, LAYERS = 4, 8, 32, 32, 2

    key = jax.random.PRNGKey(0)
    key, pkey, xkey, hkey, ckey = jax.random.split(key, 5)
    params = init_params(pkey, VOCAB, HIDDEN, LAYERS)
    x = jax.random.normal(xkey, (SEQ, BATCH, VOCAB), jnp.float32)

    fwd = jax.jit(text_generation_forward)

    # --- hidden=None path (in-kernel zero init) ---
    out, (h_n, c_n) = fwd(params, x)
    jax.block_until_ready((out, h_n, c_n))

    assert out.shape == (BATCH, SEQ, VOCAB)
    assert h_n.shape == (LAYERS, BATCH, HIDDEN)
    assert c_n.shape == (LAYERS, BATCH, HIDDEN)

    ref_out, (ref_h, ref_c) = _reference_forward(params, x)
    assert jnp.allclose(out, ref_out, rtol=2e-2, atol=2e-2)
    assert jnp.allclose(h_n, ref_h, rtol=2e-2, atol=2e-2)
    assert jnp.allclose(c_n, ref_c, rtol=2e-2, atol=2e-2)

    # --- explicit hidden path ---
    h0 = 0.1 * jax.random.normal(hkey, (LAYERS, BATCH, HIDDEN), jnp.float32)
    c0 = 0.1 * jax.random.normal(ckey, (LAYERS, BATCH, HIDDEN), jnp.float32)
    out2, (h_n2, c_n2) = fwd(params, x, (h0, c0))
    jax.block_until_ready((out2, h_n2, c_n2))

    ref_out2, (ref_h2, ref_c2) = _reference_forward(params, x, (h0, c0))
    assert jnp.allclose(out2, ref_out2, rtol=2e-2, atol=2e-2)
    assert jnp.allclose(h_n2, ref_h2, rtol=2e-2, atol=2e-2)
    assert jnp.allclose(c_n2, ref_c2, rtol=2e-2, atol=2e-2)

    print("KERNEL_OK")
</pallas_src>

<mosaic_0001>
module attributes {stable_mosaic.version = 11 : i64} {
  func.func @kernel(%arg0: memref<64x32xbf16, #tpu.memory_space<vmem>>, %arg1: memref<32x128xbf16, #tpu.memory_space<vmem>>, %arg2: memref<64x256xbf16, #tpu.memory_space<vmem>>, %arg3: memref<1x256xf32, #tpu.memory_space<vmem>>, %arg4: memref<32x32xbf16, #tpu.memory_space<vmem>>, %arg5: memref<1x32xf32, #tpu.memory_space<vmem>>, %arg6: memref<4x8x32xf32, #tpu.memory_space<vmem>>, %arg7: memref<2x4x32xf32, #tpu.memory_space<vmem>>, %arg8: memref<2x4x32xf32, #tpu.memory_space<vmem>>, %arg9: memref<8x8x32xf32, #tpu.memory_space<vmem>>) attributes {dimension_semantics = [], scalar_prefetch = 0 : i64, scratch_operands = 1 : i64, tpu.core_type = #tpu.core_type<tc>} {
    %c0 = arith.constant 0 : index
    %c0_0 = arith.constant 0 : index
    %0 = vector.load %arg2[%c0, %c0_0] : memref<64x256xbf16, #tpu.memory_space<vmem>>, vector<64x256xbf16>
    %c0_1 = arith.constant 0 : index
    %c0_2 = arith.constant 0 : index
    %1 = vector.load %arg3[%c0_1, %c0_2] : memref<1x256xf32, #tpu.memory_space<vmem>>, vector<1x256xf32>
    %c0_3 = arith.constant 0 : index
    %c0_4 = arith.constant 0 : index
    %2 = vector.load %arg0[%c0_3, %c0_4] : memref<64x32xbf16, #tpu.memory_space<vmem>>, vector<64x32xbf16>
    %c0_5 = arith.constant 0 : index
    %c0_6 = arith.constant 0 : index
    %3 = vector.load %arg1[%c0_5, %c0_6] : memref<32x128xbf16, #tpu.memory_space<vmem>>, vector<32x128xbf16>
    %cst = arith.constant dense<0.000000e+00> : vector<64x128xf32>
    %4 = tpu.matmul %2, %3, %cst {dimension_numbers = #tpu.dot_dimension_numbers<[1], [0], [0], [1], [0, 0, 1, 1], [], []>} : vector<64x32xbf16>, vector<32x128xbf16>, vector<64x128xf32> -> vector<64x128xf32>
    %cst_7 = arith.constant 0.000000e+00 : f32
    %5 = vector.broadcast %cst_7 : f32 to vector<8x32xf32>
    %cst_8 = arith.constant 0.000000e+00 : f32
    %6 = vector.broadcast %cst_8 : f32 to vector<8x32xf32>
    %cst_9 = arith.constant 0.000000e+00 : f32
    %7 = vector.broadcast %cst_9 : f32 to vector<8x32xf32>
    %8 = vector.shape_cast %1 : vector<1x256xf32> to vector<1x256xf32>
    %9 = vector.broadcast %8 : vector<1x256xf32> to vector<8x256xf32>
    %10 = vector.extract_strided_slice %9 {offsets = [0, 0], sizes = [8, 128], strides = [1, 1]} : vector<8x256xf32> to vector<8x128xf32>
    %11 = vector.extract_strided_slice %4 {offsets = [0, 0], sizes = [8, 128], strides = [1, 1]} : vector<64x128xf32> to vector<8x128xf32>
    %12 = arith.addf %10, %11 : vector<8x128xf32>
    %13 = arith.negf %12 : vector<8x128xf32>
    %14 = math.exp %13 : vector<8x128xf32>
    %cst_10 = arith.constant 1.000000e+00 : f32
    %15 = vector.broadcast %cst_10 : f32 to vector<8x128xf32>
    %16 = arith.addf %15, %14 : vector<8x128xf32>
    %17 = arith.divf %15, %16 : vector<8x128xf32>
    %18 = math.tanh %12 : vector<8x128xf32>
    %19 = vector.extract_strided_slice %17 {offsets = [0, 0], sizes = [8, 32], strides = [1, 1]} : vector<8x128xf32> to vector<8x32xf32>
    %20 = vector.extract_strided_slice %17 {offsets = [0, 32], sizes = [8, 32], strides = [1, 1]} : vector<8x128xf32> to vector<8x32xf32>
    %21 = vector.extract_strided_slice %17 {offsets = [0, 96], sizes = [8, 32], strides = [1, 1]} : vector<8x128xf32> to vector<8x32xf32>
    %22 = vector.extract_strided_slice %18 {offsets = [0, 64], sizes = [8, 32], strides = [1, 1]} : vector<8x128xf32> to vector<8x32xf32>
    %23 = arith.mulf %20, %6 : vector<8x32xf32>
    %24 = arith.mulf %19, %22 : vector<8x32xf32>
    %25 = arith.addf %23, %24 : vector<8x32xf32>
    %26 = math.tanh %25 : vector<8x32xf32>
    %27 = arith.mulf %21, %26 : vector<8x32xf32>
    %28 = tpu.concatenate %27, %5 in 1 : vector<8x32xf32>, vector<8x32xf32> -> vector<8x64xf32>
    %29 = arith.truncf %28 : vector<8x64xf32> to vector<8x64xbf16>
    %cst_11 = arith.constant dense<0.000000e+00> : vector<8x256xf32>
    %30 = tpu.matmul %29, %0, %cst_11 {dimension_numbers = #tpu.dot_dimension_numbers<[1], [0], [0], [1], [0, 0, 1, 1], [], []>} : vector<8x64xbf16>, vector<64x256xbf16>, vector<8x256xf32> -> vector<8x256xf32>
    %31 = vector.broadcast %1 : vector<1x256xf32> to vector<8x256xf32>
    %32 = arith.addf %30, %31 : vector<8x256xf32>
    %33 = vector.extract_strided_slice %32 {offsets = [0, 0], sizes = [8, 128], strides = [1, 1]} : vector<8x256xf32> to vector<8x128xf32>
    %34 = vector.extract_strided_slice %4 {offsets = [8, 0], sizes = [8, 128], strides = [1, 1]} : vector<64x128xf32> to vector<8x128xf32>
    %35 = arith.addf %33, %34 : vector<8x128xf32>
    %36 = arith.negf %35 : vector<8x128xf32>
    %37 = math.exp %36 : vector<8x128xf32>
    %cst_12 = arith.constant 1.000000e+00 : f32
    %38 = vector.broadcast %cst_12 : f32 to vector<8x128xf32>
    %39 = arith.addf %38, %37 : vector<8x128xf32>
    %40 = arith.divf %38, %39 : vector<8x128xf32>
    %41 = math.tanh %35 : vector<8x128xf32>
    %42 = vector.extract_strided_slice %40 {offsets = [0, 0], sizes = [8, 32], strides = [1, 1]} : vector<8x128xf32> to vector<8x32xf32>
    %43 = vector.extract_strided_slice %40 {offsets = [0, 32], sizes = [8, 32], strides = [1, 1]} : vector<8x128xf32> to vector<8x32xf32>
    %44 = vector.extract_strided_slice %40 {offsets = [0, 96], sizes = [8, 32], strides = [1, 1]} : vector<8x128xf32> to vector<8x32xf32>
    %45 = vector.extract_strided_slice %41 {offsets = [0, 64], sizes = [8, 32], strides = [1, 1]} : vector<8x128xf32> to vector<8x32xf32>
    %46 = arith.mulf %43, %25 : vector<8x32xf32>
    %47 = arith.mulf %42, %45 : vector<8x32xf32>
    %48 = arith.addf %46, %47 : vector<8x32xf32>
    %49 = math.tanh %48 : vector<8x32xf32>
    %50 = arith.mulf %44, %49 : vector<8x32xf32>
    %51 = vector.extract_strided_slice %32 {offsets = [0, 128], sizes = [8, 128], strides = [1, 1]} : vector<8x256xf32> to vector<8x128xf32>
    %52 = arith.negf %51 : vector<8x128xf32>
    %53 = math.exp %52 : vector<8x128xf32>
    %cst_13 = arith.constant 1.000000e+00 : f32
    %54 = vector.broadcast %cst_13 : f32 to vector<8x128xf32>
    %55 = arith.addf %54, %53 : vector<8x128xf32>
    %56 = arith.divf %54, %55 : vector<8x128xf32>
    %57 = math.tanh %51 : vector<8x128xf32>
    %58 = vector.extract_strided_slice %56 {offsets = [0, 0], sizes = [8, 32], strides = [1, 1]} : vector<8x128xf32> to vector<8x32xf32>
    %59 = vector.extract_strided_slice %56 {offsets = [0, 32], sizes = [8, 32], strides = [1, 1]} : vector<8x128xf32> to vector<8x32xf32>
    %60 = vector.extract_strided_slice %56 {offsets = [0, 96], sizes = [8, 32], strides = [1, 1]} : vector<8x128xf32> to vector<8x32xf32>
    %61 = vector.extract_strided_slice %57 {offsets = [0, 64], sizes = [8, 32], strides = [1, 1]} : vector<8x128xf32> to vector<8x32xf32>
    %62 = arith.mulf %59, %7 : vector<8x32xf32>
    %63 = arith.mulf %58, %61 : vector<8x32xf32>
    %64 = arith.addf %62, %63 : vector<8x32xf32>
    %65 = math.tanh %64 : vector<8x32xf32>
    %66 = arith.mulf %60, %65 : vector<8x32xf32>
    %c0_14 = arith.constant 0 : index
    %c0_15 = arith.constant 0 : index
    %c0_16 = arith.constant 0 : index
    %67 = vector.load %arg9[%c0_14, %c0_15, %c0_16] : memref<8x8x32xf32, #tpu.memory_space<vmem>>, vector<8x1x32xf32>
    %68 = vector.shape_cast %67 : vector<8x1x32xf32> to vector<8x32xf32>
    %69 = vector.shape_cast %66 : vector<8x32xf32> to vector<8x1x32xf32>
    tpu.vector_store %arg9[%c0_14, %c0_15, %c0_16], %69 {strides = array<i32>} : memref<8x8x32xf32, #tpu.memory_space<vmem>>, vector<8x1x32xf32>,
    %70 = tpu.concatenate %50, %66 in 1 : vector<8x32xf32>, vector<8x32xf32> -> vector<8x64xf32>
    %71 = arith.truncf %70 : vector<8x64xf32> to vector<8x64xbf16>
    %cst_17 = arith.constant dense<0.000000e+00> : vector<8x256xf32>
    %72 = tpu.matmul %71, %0, %cst_17 {dimension_numbers = #tpu.dot_dimension_numbers<[1], [0], [0], [1], [0, 0, 1, 1], [], []>} : vector<8x64xbf16>, vector<64x256xbf16>, vector<8x256xf32> -> vector<8x256xf32>
    %73 = vector.broadcast %1 : vector<1x256xf32> to vector<8x256xf32>
    %74 = arith.addf %72, %73 : vector<8x256xf32>
    %75 = vector.extract_strided_slice %74 {offsets = [0, 0], sizes = [8, 128], strides = [1, 1]} : vector<8x256xf32> to vector<8x128xf32>
    %76 = vector.extract_strided_slice %4 {offsets = [16, 0], sizes = [8, 128], strides = [1, 1]} : vector<64x128xf32> to vector<8x128xf32>
    %77 = arith.addf %75, %76 : vector<8x128xf32>
    %78 = arith.negf %77 : vector<8x128xf32>
    %79 = math.exp %78 : vector<8x128xf32>
    %cst_18 = arith.constant 1.000000e+00 : f32
    %80 = vector.broadcast %cst_18 : f32 to vector<8x128xf32>
    %81 = arith.addf %80, %79 : vector<8x128xf32>
    %82 = arith.divf %80, %81 : vector<8x128xf32>
    %83 = math.tanh %77 : vector<8x128xf32>
    %84 = vector.extract_strided_slice %82 {offsets = [0, 0], sizes = [8, 32], strides = [1, 1]} : vector<8x128xf32> to vector<8x32xf32>
    %85 = vector.extract_strided_slice %82 {offsets = [0, 32], sizes = [8, 32], strides = [1, 1]} : vector<8x128xf32> to vector<8x32xf32>
    %86 = vector.extract_strided_slice %82 {offsets = [0, 96], sizes = [8, 32], strides = [1, 1]} : vector<8x128xf32> to vector<8x32xf32>
    %87 = vector.extract_strided_slice %83 {offsets = [0, 64], sizes = [8, 32], strides = [1, 1]} : vector<8x128xf32> to vector<8x32xf32>
    %88 = arith.mulf %85, %48 : vector<8x32xf32>
    %89 = arith.mulf %84, %87 : vector<8x32xf32>
    %90 = arith.addf %88, %89 : vector<8x32xf32>
    %91 = math.tanh %90 : vector<8x32xf32>
    %92 = arith.mulf %86, %91 : vector<8x32xf32>
    %93 = vector.extract_strided_slice %74 {offsets = [0, 128], sizes = [8, 128], strides = [1, 1]} : vector<8x256xf32> to vector<8x128xf32>
    %94 = arith.negf %93 : vector<8x128xf32>
    %95 = math.exp %94 : vector<8x128xf32>
    %cst_19 = arith.constant 1.000000e+00 : f32
    %96 = vector.broadcast %cst_19 : f32 to vector<8x128xf32>
    %97 = arith.addf %96, %95 : vector<8x128xf32>
    %98 = arith.divf %96, %97 : vector<8x128xf32>
    %99 = math.tanh %93 : vector<8x128xf32>
    %100 = vector.extract_strided_slice %98 {offsets = [0, 0], sizes = [8, 32], strides = [1, 1]} : vector<8x128xf32> to vector<8x32xf32>
    %101 = vector.extract_strided_slice %98 {offsets = [0, 32], sizes = [8, 32], strides = [1, 1]} : vector<8x128xf32> to vector<8x32xf32>
    %102 = vector.extract_strided_slice %98 {offsets = [0, 96], sizes = [8, 32], strides = [1, 1]} : vector<8x128xf32> to vector<8x32xf32>
    %103 = vector.extract_strided_slice %99 {offsets = [0, 64], sizes = [8, 32], strides = [1, 1]} : vector<8x128xf32> to vector<8x32xf32>
    %104 = arith.mulf %101, %64 : vector<8x32xf32>
    %105 = arith.mulf %100, %103 : vector<8x32xf32>
    %106 = arith.addf %104, %105 : vector<8x32xf32>
    %107 = math.tanh %106 : vector<8x32xf32>
    %108 = arith.mulf %102, %107 : vector<8x32xf32>
    %c0_20 = arith.constant 0 : index
    %c1 = arith.constant 1 : index
    %c0_21 = arith.constant 0 : index
    %109 = vector.load %arg9[%c0_20, %c1, %c0_21] : memref<8x8x32xf32, #tpu.memory_space<vmem>>, vector<8x1x32xf32>
    %110 = vector.shape_cast %109 : vector<8x1x32xf32> to vector<8x32xf32>
    %111 = vector.shape_cast %108 : vector<8x32xf32> to vector<8x1x32xf32>
    tpu.vector_store %arg9[%c0_20, %c1, %c0_21], %111 {strides = array<i32>} : memref<8x8x32xf32, #tpu.memory_space<vmem>>, vector<8x1x32xf32>,
    %112 = tpu.concatenate %92, %108 in 1 : vector<8x32xf32>, vector<8x32xf32> -> vector<8x64xf32>
    %113 = arith.truncf %112 : vector<8x64xf32> to vector<8x64xbf16>
    %cst_22 = arith.constant dense<0.000000e+00> : vector<8x256xf32>
    %114 = tpu.matmul %113, %0, %cst_22 {dimension_numbers = #tpu.dot_dimension_numbers<[1], [0], [0], [1], [0, 0, 1, 1], [], []>} : vector<8x64xbf16>, vector<64x256xbf16>, vector<8x256xf32> -> vector<8x256xf32>
    %115 = vector.broadcast %1 : vector<1x256xf32> to vector<8x256xf32>
    %116 = arith.addf %114, %115 : vector<8x256xf32>
    %117 = vector.extract_strided_slice %116 {offsets = [0, 0], sizes = [8, 128], strides = [1, 1]} : vector<8x256xf32> to vector<8x128xf32>
    %118 = vector.extract_strided_slice %4 {offsets = [24, 0], sizes = [8, 128], strides = [1, 1]} : vector<64x128xf32> to vector<8x128xf32>
    %119 = arith.addf %117, %118 : vector<8x128xf32>
    %120 = arith.negf %119 : vector<8x128xf32>
    %121 = math.exp %120 : vector<8x128xf32>
    %cst_23 = arith.constant 1.000000e+00 : f32
    %122 = vector.broadcast %cst_23 : f32 to vector<8x128xf32>
    %123 = arith.addf %122, %121 : vector<8x128xf32>
    %124 = arith.divf %122, %123 : vector<8x128xf32>
    %125 = math.tanh %119 : vector<8x128xf32>
    %126 = vector.extract_strided_slice %124 {offsets = [0, 0], sizes = [8, 32], strides = [1, 1]} : vector<8x128xf32> to vector<8x32xf32>
    %127 = vector.extract_strided_slice %124 {offsets = [0, 32], sizes = [8, 32], strides = [1, 1]} : vector<8x128xf32> to vector<8x32xf32>
    %128 = vector.extract_strided_slice %124 {offsets = [0, 96], sizes = [8, 32], strides = [1, 1]} : vector<8x128xf32> to vector<8x32xf32>
    %129 = vector.extract_strided_slice %125 {offsets = [0, 64], sizes = [8, 32], strides = [1, 1]} : vector<8x128xf32> to vector<8x32xf32>
    %130 = arith.mulf %127, %90 : vector<8x32xf32>
    %131 = arith.mulf %126, %129 : vector<8x32xf32>
    %132 = arith.addf %130, %131 : vector<8x32xf32>
    %133 = math.tanh %132 : vector<8x32xf32>
    %134 = arith.mulf %128, %133 : vector<8x32xf32>
    %135 = vector.extract_strided_slice %116 {offsets = [0, 128], sizes = [8, 128], strides = [1, 1]} : vector<8x256xf32> to vector<8x128xf32>
    %136 = arith.negf %135 : vector<8x128xf32>
    %137 = math.exp %136 : vector<8x128xf32>
    %cst_24 = arith.constant 1.000000e+00 : f32
    %138 = vector.broadcast %cst_24 : f32 to vector<8x128xf32>
    %139 = arith.addf %138, %137 : vector<8x128xf32>
    %140 = arith.divf %138, %139 : vector<8x128xf32>
    %141 = math.tanh %135 : vector<8x128xf32>
    %142 = vector.extract_strided_slice %140 {offsets = [0, 0], sizes = [8, 32], strides = [1, 1]} : vector<8x128xf32> to vector<8x32xf32>
    %143 = vector.extract_strided_slice %140 {offsets = [0, 32], sizes = [8, 32], strides = [1, 1]} : vector<8x128xf32> to vector<8x32xf32>
    %144 = vector.extract_strided_slice %140 {offsets = [0, 96], sizes = [8, 32], strides = [1, 1]} : vector<8x128xf32> to vector<8x32xf32>
    %145 = vector.extract_strided_slice %141 {offsets = [0, 64], sizes = [8, 32], strides = [1, 1]} : vector<8x128xf32> to vector<8x32xf32>
    %146 = arith.mulf %143, %106 : vector<8x32xf32>
    %147 = arith.mulf %142, %145 : vector<8x32xf32>
    %148 = arith.addf %146, %147 : vector<8x32xf32>
    %149 = math.tanh %148 : vector<8x32xf32>
    %150 = arith.mulf %144, %149 : vector<8x32xf32>
    %c0_25 = arith.constant 0 : index
    %c2 = arith.constant 2 : index
    %c0_26 = arith.constant 0 : index
    %151 = vector.load %arg9[%c0_25, %c2, %c0_26] : memref<8x8x32xf32, #tpu.memory_space<vmem>>, vector<8x1x32xf32>
    %152 = vector.shape_cast %151 : vector<8x1x32xf32> to vector<8x32xf32>
    %153 = vector.shape_cast %150 : vector<8x32xf32> to vector<8x1x32xf32>
    tpu.vector_store %arg9[%c0_25, %c2, %c0_26], %153 {strides = array<i32>} : memref<8x8x32xf32, #tpu.memory_space<vmem>>, vector<8x1x32xf32>,
    %154 = tpu.concatenate %134, %150 in 1 : vector<8x32xf32>, vector<8x32xf32> -> vector<8x64xf32>
    %155 = arith.truncf %154 : vector<8x64xf32> to vector<8x64xbf16>
    %cst_27 = arith.constant dense<0.000000e+00> : vector<8x256xf32>
    %156 = tpu.matmul %155, %0, %cst_27 {dimension_numbers = #tpu.dot_dimension_numbers<[1], [0], [0], [1], [0, 0, 1, 1], [], []>} : vector<8x64xbf16>, vector<64x256xbf16>, vector<8x256xf32> -> vector<8x256xf32>
    %157 = vector.broadcast %1 : vector<1x256xf32> to vector<8x256xf32>
    %158 = arith.addf %156, %157 : vector<8x256xf32>
    %159 = vector.extract_strided_slice %158 {offsets = [0, 0], sizes = [8, 128], strides = [1, 1]} : vector<8x256xf32> to vector<8x128xf32>
    %160 = vector.extract_strided_slice %4 {offsets = [32, 0], sizes = [8, 128], strides = [1, 1]} : vector<64x128xf32> to vector<8x128xf32>
    %161 = arith.addf %159, %160 : vector<8x128xf32>
    %162 = arith.negf %161 : vector<8x128xf32>
    %163 = math.exp %162 : vector<8x128xf32>
    %cst_28 = arith.constant 1.000000e+00 : f32
    %164 = vector.broadcast %cst_28 : f32 to vector<8x128xf32>
    %165 = arith.addf %164, %163 : vector<8x128xf32>
    %166 = arith.divf %164, %165 : vector<8x128xf32>
    %167 = math.tanh %161 : vector<8x128xf32>
    %168 = vector.extract_strided_slice %166 {offsets = [0, 0], sizes = [8, 32], strides = [1, 1]} : vector<8x128xf32> to vector<8x32xf32>
    %169 = vector.extract_strided_slice %166 {offsets = [0, 32], sizes = [8, 32], strides = [1, 1]} : vector<8x128xf32> to vector<8x32xf32>
    %170 = vector.extract_strided_slice %166 {offsets = [0, 96], sizes = [8, 32], strides = [1, 1]} : vector<8x128xf32> to vector<8x32xf32>
    %171 = vector.extract_strided_slice %167 {offsets = [0, 64], sizes = [8, 32], strides = [1, 1]} : vector<8x128xf32> to vector<8x32xf32>
    %172 = arith.mulf %169, %132 : vector<8x32xf32>
    %173 = arith.mulf %168, %171 : vector<8x32xf32>
    %174 = arith.addf %172, %173 : vector<8x32xf32>
    %175 = math.tanh %174 : vector<8x32xf32>
    %176 = arith.mulf %170, %175 : vector<8x32xf32>
    %177 = vector.extract_strided_slice %158 {offsets = [0, 128], sizes = [8, 128], strides = [1, 1]} : vector<8x256xf32> to vector<8x128xf32>
    %178 = arith.negf %177 : vector<8x128xf32>
    %179 = math.exp %178 : vector<8x128xf32>
    %cst_29 = arith.constant 1.000000e+00 : f32
    %180 = vector.broadcast %cst_29 : f32 to vector<8x128xf32>
    %181 = arith.addf %180, %179 : vector<8x128xf32>
    %182 = arith.divf %180, %181 : vector<8x128xf32>
    %183 = math.tanh %177 : vector<8x128xf32>
    %184 = vector.extract_strided_slice %182 {offsets = [0, 0], sizes = [8, 32], strides = [1, 1]} : vector<8x128xf32> to vector<8x32xf32>
    %185 = vector.extract_strided_slice %182 {offsets = [0, 32], sizes = [8, 32], strides = [1, 1]} : vector<8x128xf32> to vector<8x32xf32>
    %186 = vector.extract_strided_slice %182 {offsets = [0, 96], sizes = [8, 32], strides = [1, 1]} : vector<8x128xf32> to vector<8x32xf32>
    %187 = vector.extract_strided_slice %183 {offsets = [0, 64], sizes = [8, 32], strides = [1, 1]} : vector<8x128xf32> to vector<8x32xf32>
    %188 = arith.mulf %185, %148 : vector<8x32xf32>
    %189 = arith.mulf %184, %187 : vector<8x32xf32>
    %190 = arith.addf %188, %189 : vector<8x32xf32>
    %191 = math.tanh %190 : vector<8x32xf32>
    %192 = arith.mulf %186, %191 : vector<8x32xf32>
    %c0_30 = arith.constant 0 : index
    %c3 = arith.constant 3 : index
    %c0_31 = arith.constant 0 : index
    %193 = vector.load %arg9[%c0_30, %c3, %c0_31] : memref<8x8x32xf32, #tpu.memory_space<vmem>>, vector<8x1x32xf32>
    %194 = vector.shape_cast %193 : vector<8x1x32xf32> to vector<8x32xf32>
    %195 = vector.shape_cast %192 : vector<8x32xf32> to vector<8x1x32xf32>
    tpu.vector_store %arg9[%c0_30, %c3, %c0_31], %195 {strides = array<i32>} : memref<8x8x32xf32, #tpu.memory_space<vmem>>, vector<8x1x32xf32>,
    %196 = tpu.concatenate %176, %192 in 1 : vector<8x32xf32>, vector<8x32xf32> -> vector<8x64xf32>
    %197 = arith.truncf %196 : vector<8x64xf32> to vector<8x64xbf16>
    %cst_32 = arith.constant dense<0.000000e+00> : vector<8x256xf32>
    %198 = tpu.matmul %197, %0, %cst_32 {dimension_numbers = #tpu.dot_dimension_numbers<[1], [0], [0], [1], [0, 0, 1, 1], [], []>} : vector<8x64xbf16>, vector<64x256xbf16>, vector<8x256xf32> -> vector<8x256xf32>
    %199 = vector.broadcast %1 : vector<1x256xf32> to vector<8x256xf32>
    %200 = arith.addf %198, %199 : vector<8x256xf32>
    %201 = vector.extract_strided_slice %200 {offsets = [0, 0], sizes = [8, 128], strides = [1, 1]} : vector<8x256xf32> to vector<8x128xf32>
    %202 = vector.extract_strided_slice %4 {offsets = [40, 0], sizes = [8, 128], strides = [1, 1]} : vector<64x128xf32> to vector<8x128xf32>
    %203 = arith.addf %201, %202 : vector<8x128xf32>
    %204 = arith.negf %203 : vector<8x128xf32>
    %205 = math.exp %204 : vector<8x128xf32>
    %cst_33 = arith.constant 1.000000e+00 : f32
    %206 = vector.broadcast %cst_33 : f32 to vector<8x128xf32>
    %207 = arith.addf %206, %205 : vector<8x128xf32>
    %208 = arith.divf %206, %207 : vector<8x128xf32>
    %209 = math.tanh %203 : vector<8x128xf32>
    %210 = vector.extract_strided_slice %208 {offsets = [0, 0], sizes = [8, 32], strides = [1, 1]} : vector<8x128xf32> to vector<8x32xf32>
    %211 = vector.extract_strided_slice %208 {offsets = [0, 32], sizes = [8, 32], strides = [1, 1]} : vector<8x128xf32> to vector<8x32xf32>
    %212 = vector.extract_strided_slice %208 {offsets = [0, 96], sizes = [8, 32], strides = [1, 1]} : vector<8x128xf32> to vector<8x32xf32>
    %213 = vector.extract_strided_slice %209 {offsets = [0, 64], sizes = [8, 32], strides = [1, 1]} : vector<8x128xf32> to vector<8x32xf32>
    %214 = arith.mulf %211, %174 : vector<8x32xf32>
    %215 = arith.mulf %210, %213 : vector<8x32xf32>
    %216 = arith.addf %214, %215 : vector<8x32xf32>
    %217 = math.tanh %216 : vector<8x32xf32>
    %218 = arith.mulf %212, %217 : vector<8x32xf32>
    %219 = vector.extract_strided_slice %200 {offsets = [0, 128], sizes = [8, 128], strides = [1, 1]} : vector<8x256xf32> to vector<8x128xf32>
    %220 = arith.negf %219 : vector<8x128xf32>
    %221 = math.exp %220 : vector<8x128xf32>
    %cst_34 = arith.constant 1.000000e+00 : f32
    %222 = vector.broadcast %cst_34 : f32 to vector<8x128xf32>
    %223 = arith.addf %222, %221 : vector<8x128xf32>
    %224 = arith.divf %222, %223 : vector<8x128xf32>
    %225 = math.tanh %219 : vector<8x128xf32>
    %226 = vector.extract_strided_slice %224 {offsets = [0, 0], sizes = [8, 32], strides = [1, 1]} : vector<8x128xf32> to vector<8x32xf32>
    %227 = vector.extract_strided_slice %224 {offsets = [0, 32], sizes = [8, 32], strides = [1, 1]} : vector<8x128xf32> to vector<8x32xf32>
    %228 = vector.extract_strided_slice %224 {offsets = [0, 96], sizes = [8, 32], strides = [1, 1]} : vector<8x128xf32> to vector<8x32xf32>
    %229 = vector.extract_strided_slice %225 {offsets = [0, 64], sizes = [8, 32], strides = [1, 1]} : vector<8x128xf32> to vector<8x32xf32>
    %230 = arith.mulf %227, %190 : vector<8x32xf32>
    %231 = arith.mulf %226, %229 : vector<8x32xf32>
    %232 = arith.addf %230, %231 : vector<8x32xf32>
    %233 = math.tanh %232 : vector<8x32xf32>
    %234 = arith.mulf %228, %233 : vector<8x32xf32>
    %c0_35 = arith.constant 0 : index
    %c4 = arith.constant 4 : index
    %c0_36 = arith.constant 0 : index
    %235 = vector.load %arg9[%c0_35, %c4, %c0_36] : memref<8x8x32xf32, #tpu.memory_space<vmem>>, vector<8x1x32xf32>
    %236 = vector.shape_cast %235 : vector<8x1x32xf32> to vector<8x32xf32>
    %237 = vector.shape_cast %234 : vector<8x32xf32> to vector<8x1x32xf32>
    tpu.vector_store %arg9[%c0_35, %c4, %c0_36], %237 {strides = array<i32>} : memref<8x8x32xf32, #tpu.memory_space<vmem>>, vector<8x1x32xf32>,
    %238 = tpu.concatenate %218, %234 in 1 : vector<8x32xf32>, vector<8x32xf32> -> vector<8x64xf32>
    %239 = arith.truncf %238 : vector<8x64xf32> to vector<8x64xbf16>
    %cst_37 = arith.constant dense<0.000000e+00> : vector<8x256xf32>
    %240 = tpu.matmul %239, %0, %cst_37 {dimension_numbers = #tpu.dot_dimension_numbers<[1], [0], [0], [1], [0, 0, 1, 1], [], []>} : vector<8x64xbf16>, vector<64x256xbf16>, vector<8x256xf32> -> vector<8x256xf32>
    %241 = vector.broadcast %1 : vector<1x256xf32> to vector<8x256xf32>
    %242 = arith.addf %240, %241 : vector<8x256xf32>
    %243 = vector.extract_strided_slice %242 {offsets = [0, 0], sizes = [8, 128], strides = [1, 1]} : vector<8x256xf32> to vector<8x128xf32>
    %244 = vector.extract_strided_slice %4 {offsets = [48, 0], sizes = [8, 128], strides = [1, 1]} : vector<64x128xf32> to vector<8x128xf32>
    %245 = arith.addf %243, %244 : vector<8x128xf32>
    %246 = arith.negf %245 : vector<8x128xf32>
    %247 = math.exp %246 : vector<8x128xf32>
    %cst_38 = arith.constant 1.000000e+00 : f32
    %248 = vector.broadcast %cst_38 : f32 to vector<8x128xf32>
    %249 = arith.addf %248, %247 : vector<8x128xf32>
    %250 = arith.divf %248, %249 : vector<8x128xf32>
    %251 = math.tanh %245 : vector<8x128xf32>
    %252 = vector.extract_strided_slice %250 {offsets = [0, 0], sizes = [8, 32], strides = [1, 1]} : vector<8x128xf32> to vector<8x32xf32>
    %253 = vector.extract_strided_slice %250 {offsets = [0, 32], sizes = [8, 32], strides = [1, 1]} : vector<8x128xf32> to vector<8x32xf32>
    %254 = vector.extract_strided_slice %250 {offsets = [0, 96], sizes = [8, 32], strides = [1, 1]} : vector<8x128xf32> to vector<8x32xf32>
    %255 = vector.extract_strided_slice %251 {offsets = [0, 64], sizes = [8, 32], strides = [1, 1]} : vector<8x128xf32> to vector<8x32xf32>
    %256 = arith.mulf %253, %216 : vector<8x32xf32>
    %257 = arith.mulf %252, %255 : vector<8x32xf32>
    %258 = arith.addf %256, %257 : vector<8x32xf32>
    %259 = math.tanh %258 : vector<8x32xf32>
    %260 = arith.mulf %254, %259 : vector<8x32xf32>
    %261 = vector.extract_strided_slice %242 {offsets = [0, 128], sizes = [8, 128], strides = [1, 1]} : vector<8x256xf32> to vector<8x128xf32>
    %262 = arith.negf %261 : vector<8x128xf32>
    %263 = math.exp %262 : vector<8x128xf32>
    %cst_39 = arith.constant 1.000000e+00 : f32
    %264 = vector.broadcast %cst_39 : f32 to vector<8x128xf32>
    %265 = arith.addf %264, %263 : vector<8x128xf32>
    %266 = arith.divf %264, %265 : vector<8x128xf32>
    %267 = math.tanh %261 : vector<8x128xf32>
    %268 = vector.extract_strided_slice %266 {offsets = [0, 0], sizes = [8, 32], strides = [1, 1]} : vector<8x128xf32> to vector<8x32xf32>
    %269 = vector.extract_strided_slice %266 {offsets = [0, 32], sizes = [8, 32], strides = [1, 1]} : vector<8x128xf32> to vector<8x32xf32>
    %270 = vector.extract_strided_slice %266 {offsets = [0, 96], sizes = [8, 32], strides = [1, 1]} : vector<8x128xf32> to vector<8x32xf32>
    %271 = vector.extract_strided_slice %267 {offsets = [0, 64], sizes = [8, 32], strides = [1, 1]} : vector<8x128xf32> to vector<8x32xf32>
    %272 = arith.mulf %269, %232 : vector<8x32xf32>
    %273 = arith.mulf %268, %271 : vector<8x32xf32>
    %274 = arith.addf %272, %273 : vector<8x32xf32>
    %275 = math.tanh %274 : vector<8x32xf32>
    %276 = arith.mulf %270, %275 : vector<8x32xf32>
    %c0_40 = arith.constant 0 : index
    %c5 = arith.constant 5 : index
    %c0_41 = arith.constant 0 : index
    %277 = vector.load %arg9[%c0_40, %c5, %c0_41] : memref<8x8x32xf32, #tpu.memory_space<vmem>>, vector<8x1x32xf32>
    %278 = vector.shape_cast %277 : vector<8x1x32xf32> to vector<8x32xf32>
    %279 = vector.shape_cast %276 : vector<8x32xf32> to vector<8x1x32xf32>
    tpu.vector_store %arg9[%c0_40, %c5, %c0_41], %279 {strides = array<i32>} : memref<8x8x32xf32, #tpu.memory_space<vmem>>, vector<8x1x32xf32>,
    %280 = tpu.concatenate %260, %276 in 1 : vector<8x32xf32>, vector<8x32xf32> -> vector<8x64xf32>
    %281 = arith.truncf %280 : vector<8x64xf32> to vector<8x64xbf16>
    %cst_42 = arith.constant dense<0.000000e+00> : vector<8x256xf32>
    %282 = tpu.matmul %281, %0, %cst_42 {dimension_numbers = #tpu.dot_dimension_numbers<[1], [0], [0], [1], [0, 0, 1, 1], [], []>} : vector<8x64xbf16>, vector<64x256xbf16>, vector<8x256xf32> -> vector<8x256xf32>
    %283 = vector.broadcast %1 : vector<1x256xf32> to vector<8x256xf32>
    %284 = arith.addf %282, %283 : vector<8x256xf32>
    %285 = vector.extract_strided_slice %284 {offsets = [0, 0], sizes = [8, 128], strides = [1, 1]} : vector<8x256xf32> to vector<8x128xf32>
    %286 = vector.extract_strided_slice %4 {offsets = [56, 0], sizes = [8, 128], strides = [1, 1]} : vector<64x128xf32> to vector<8x128xf32>
    %287 = arith.addf %285, %286 : vector<8x128xf32>
    %288 = arith.negf %287 : vector<8x128xf32>
    %289 = math.exp %288 : vector<8x128xf32>
    %cst_43 = arith.constant 1.000000e+00 : f32
    %290 = vector.broadcast %cst_43 : f32 to vector<8x128xf32>
    %291 = arith.addf %290, %289 : vector<8x128xf32>
    %292 = arith.divf %290, %291 : vector<8x128xf32>
    %293 = math.tanh %287 : vector<8x128xf32>
    %294 = vector.extract_strided_slice %292 {offsets = [0, 0], sizes = [8, 32], strides = [1, 1]} : vector<8x128xf32> to vector<8x32xf32>
    %295 = vector.extract_strided_slice %292 {offsets = [0, 32], sizes = [8, 32], strides = [1, 1]} : vector<8x128xf32> to vector<8x32xf32>
    %296 = vector.extract_strided_slice %292 {offsets = [0, 96], sizes = [8, 32], strides = [1, 1]} : vector<8x128xf32> to vector<8x32xf32>
    %297 = vector.extract_strided_slice %293 {offsets = [0, 64], sizes = [8, 32], strides = [1, 1]} : vector<8x128xf32> to vector<8x32xf32>
    %298 = arith.mulf %295, %258 : vector<8x32xf32>
    %299 = arith.mulf %294, %297 : vector<8x32xf32>
    %300 = arith.addf %298, %299 : vector<8x32xf32>
    %301 = math.tanh %300 : vector<8x32xf32>
    %302 = arith.mulf %296, %301 : vector<8x32xf32>
    %303 = vector.extract_strided_slice %284 {offsets = [0, 128], sizes = [8, 128], strides = [1, 1]} : vector<8x256xf32> to vector<8x128xf32>
    %304 = arith.negf %303 : vector<8x128xf32>
    %305 = math.exp %304 : vector<8x128xf32>
    %cst_44 = arith.constant 1.000000e+00 : f32
    %306 = vector.broadcast %cst_44 : f32 to vector<8x128xf32>
    %307 = arith.addf %306, %305 : vector<8x128xf32>
    %308 = arith.divf %306, %307 : vector<8x128xf32>
    %309 = math.tanh %303 : vector<8x128xf32>
    %310 = vector.extract_strided_slice %308 {offsets = [0, 0], sizes = [8, 32], strides = [1, 1]} : vector<8x128xf32> to vector<8x32xf32>
    %311 = vector.extract_strided_slice %308 {offsets = [0, 32], sizes = [8, 32], strides = [1, 1]} : vector<8x128xf32> to vector<8x32xf32>
    %312 = vector.extract_strided_slice %308 {offsets = [0, 96], sizes = [8, 32], strides = [1, 1]} : vector<8x128xf32> to vector<8x32xf32>
    %313 = vector.extract_strided_slice %309 {offsets = [0, 64], sizes = [8, 32], strides = [1, 1]} : vector<8x128xf32> to vector<8x32xf32>
    %314 = arith.mulf %311, %274 : vector<8x32xf32>
    %315 = arith.mulf %310, %313 : vector<8x32xf32>
    %316 = arith.addf %314, %315 : vector<8x32xf32>
    %317 = math.tanh %316 : vector<8x32xf32>
    %318 = arith.mulf %312, %317 : vector<8x32xf32>
    %c0_45 = arith.constant 0 : index
    %c6 = arith.constant 6 : index
    %c0_46 = arith.constant 0 : index
    %319 = vector.load %arg9[%c0_45, %c6, %c0_46] : memref<8x8x32xf32, #tpu.memory_space<vmem>>, vector<8x1x32xf32>
    %320 = vector.shape_cast %319 : vector<8x1x32xf32> to vector<8x32xf32>
    %321 = vector.shape_cast %318 : vector<8x32xf32> to vector<8x1x32xf32>
    tpu.vector_store %arg9[%c0_45, %c6, %c0_46], %321 {strides = array<i32>} : memref<8x8x32xf32, #tpu.memory_space<vmem>>, vector<8x1x32xf32>,
    %322 = tpu.concatenate %302, %318 in 1 : vector<8x32xf32>, vector<8x32xf32> -> vector<8x64xf32>
    %323 = arith.truncf %322 : vector<8x64xf32> to vector<8x64xbf16>
    %cst_47 = arith.constant dense<0.000000e+00> : vector<8x256xf32>
    %324 = tpu.matmul %323, %0, %cst_47 {dimension_numbers = #tpu.dot_dimension_numbers<[1], [0], [0], [1], [0, 0, 1, 1], [], []>} : vector<8x64xbf16>, vector<64x256xbf16>, vector<8x256xf32> -> vector<8x256xf32>
    %325 = vector.broadcast %1 : vector<1x256xf32> to vector<8x256xf32>
    %326 = arith.addf %324, %325 : vector<8x256xf32>
    %327 = vector.extract_strided_slice %326 {offsets = [0, 128], sizes = [8, 128], strides = [1, 1]} : vector<8x256xf32> to vector<8x128xf32>
    %328 = arith.negf %327 : vector<8x128xf32>
    %329 = math.exp %328 : vector<8x128xf32>
    %cst_48 = arith.constant 1.000000e+00 : f32
    %330 = vector.broadcast %cst_48 : f32 to vector<8x128xf32>
    %331 = arith.addf %330, %329 : vector<8x128xf32>
    %332 = arith.divf %330, %331 : vector<8x128xf32>
    %333 = math.tanh %327 : vector<8x128xf32>
    %334 = vector.extract_strided_slice %332 {offsets = [0, 0], sizes = [8, 32], strides = [1, 1]} : vector<8x128xf32> to vector<8x32xf32>
    %335 = vector.extract_strided_slice %332 {offsets = [0, 32], sizes = [8, 32], strides = [1, 1]} : vector<8x128xf32> to vector<8x32xf32>
    %336 = vector.extract_strided_slice %332 {offsets = [0, 96], sizes = [8, 32], strides = [1, 1]} : vector<8x128xf32> to vector<8x32xf32>
    %337 = vector.extract_strided_slice %333 {offsets = [0, 64], sizes = [8, 32], strides = [1, 1]} : vector<8x128xf32> to vector<8x32xf32>
    %338 = arith.mulf %335, %316 : vector<8x32xf32>
    %339 = arith.mulf %334, %337 : vector<8x32xf32>
    %340 = arith.addf %338, %339 : vector<8x32xf32>
    %341 = math.tanh %340 : vector<8x32xf32>
    %342 = arith.mulf %336, %341 : vector<8x32xf32>
    %c0_49 = arith.constant 0 : index
    %c7 = arith.constant 7 : index
    %c0_50 = arith.constant 0 : index
    %343 = vector.load %arg9[%c0_49, %c7, %c0_50] : memref<8x8x32xf32, #tpu.memory_space<vmem>>, vector<8x1x32xf32>
    %344 = vector.shape_cast %343 : vector<8x1x32xf32> to vector<8x32xf32>
    %345 = vector.shape_cast %342 : vector<8x32xf32> to vector<8x1x32xf32>
    tpu.vector_store %arg9[%c0_49, %c7, %c0_50], %345 {strides = array<i32>} : memref<8x8x32xf32, #tpu.memory_space<vmem>>, vector<8x1x32xf32>,
    %c0_51 = arith.constant 0 : index
    %c0_52 = arith.constant 0 : index
    %c0_53 = arith.constant 0 : index
    %346 = vector.load %arg9[%c0_51, %c0_52, %c0_53] : memref<8x8x32xf32, #tpu.memory_space<vmem>>, vector<8x8x32xf32>
    %347 = vector.shape_cast %346 : vector<8x8x32xf32> to vector<64x32xf32>
    %348 = vector.extract_strided_slice %347 {offsets = [0, 0], sizes = [32, 32], strides = [1, 1]} : vector<64x32xf32> to vector<32x32xf32>
    %349 = arith.truncf %348 : vector<32x32xf32> to vector<32x32xbf16>
    %c0_54 = arith.constant 0 : index
    %c0_55 = arith.constant 0 : index
    %350 = vector.load %arg4[%c0_54, %c0_55] : memref<32x32xbf16, #tpu.memory_space<vmem>>, vector<32x32xbf16>
    %cst_56 = arith.constant dense<0.000000e+00> : vector<32x32xf32>
    %351 = tpu.matmul %349, %350, %cst_56 {dimension_numbers = #tpu.dot_dimension_numbers<[1], [0], [0], [1], [0, 0, 1, 1], [], []>} : vector<32x32xbf16>, vector<32x32xbf16>, vector<32x32xf32> -> vector<32x32xf32>
    %c0_57 = arith.constant 0 : index
    %c0_58 = arith.constant 0 : index
    %352 = vector.load %arg5[%c0_57, %c0_58] : memref<1x32xf32, #tpu.memory_space<vmem>>, vector<1x32xf32>
    %353 = vector.broadcast %352 : vector<1x32xf32> to vector<32x32xf32>
    %354 = arith.addf %351, %353 : vector<32x32xf32>
    %355 = vector.shape_cast %354 : vector<32x32xf32> to vector<4x8x32xf32>
    %c0_59 = arith.constant 0 : index
    %c0_60 = arith.constant 0 : index
    %c0_61 = arith.constant 0 : index
    %356 = vector.load %arg6[%c0_59, %c0_60, %c0_61] : memref<4x8x32xf32, #tpu.memory_space<vmem>>, vector<4x8x32xf32>
    tpu.vector_store %arg6[%c0_59, %c0_60, %c0_61], %355 {strides = array<i32>} : memref<4x8x32xf32, #tpu.memory_space<vmem>>, vector<4x8x32xf32>,
    %357 = vector.extract_strided_slice %302 {offsets = [0, 0], sizes = [4, 32], strides = [1, 1]} : vector<8x32xf32> to vector<4x32xf32>
    %c0_62 = arith.constant 0 : index
    %c0_63 = arith.constant 0 : index
    %c0_64 = arith.constant 0 : index
    %358 = vector.load %arg7[%c0_62, %c0_63, %c0_64] : memref<2x4x32xf32, #tpu.memory_space<vmem>>, vector<1x4x32xf32>
    %359 = vector.shape_cast %358 : vector<1x4x32xf32> to vector<4x32xf32>
    %360 = vector.shape_cast %357 : vector<4x32xf32> to vector<1x4x32xf32>
    tpu.vector_store %arg7[%c0_62, %c0_63, %c0_64], %360 {strides = array<i32>} : memref<2x4x32xf32, #tpu.memory_space<vmem>>, vector<1x4x32xf32>,
    %361 = vector.extract_strided_slice %300 {offsets = [0, 0], sizes = [4, 32], strides = [1, 1]} : vector<8x32xf32> to vector<4x32xf32>
    %c0_65 = arith.constant 0 : index
    %c0_66 = arith.constant 0 : index
    %c0_67 = arith.constant 0 : index
    %362 = vector.load %arg8[%c0_65, %c0_66, %c0_67] : memref<2x4x32xf32, #tpu.memory_space<vmem>>, vector<1x4x32xf32>
    %363 = vector.shape_cast %362 : vector<1x4x32xf32> to vector<4x32xf32>
    %364 = vector.shape_cast %361 : vector<4x32xf32> to vector<1x4x32xf32>
    tpu.vector_store %arg8[%c0_65, %c0_66, %c0_67], %364 {strides = array<i32>} : memref<2x4x32xf32, #tpu.memory_space<vmem>>, vector<1x4x32xf32>,
    %365 = vector.extract_strided_slice %342 {offsets = [0, 0], sizes = [4, 32], strides = [1, 1]} : vector<8x32xf32> to vector<4x32xf32>
    %c1_68 = arith.constant 1 : index
    %c0_69 = arith.constant 0 : index
    %c0_70 = arith.constant 0 : index
    %366 = vector.load %arg7[%c1_68, %c0_69, %c0_70] : memref<2x4x32xf32, #tpu.memory_space<vmem>>, vector<1x4x32xf32>
    %367 = vector.shape_cast %366 : vector<1x4x32xf32> to vector<4x32xf32>
    %368 = vector.shape_cast %365 : vector<4x32xf32> to vector<1x4x32xf32>
    tpu.vector_store %arg7[%c1_68, %c0_69, %c0_70], %368 {strides = array<i32>} : memref<2x4x32xf32, #tpu.memory_space<vmem>>, vector<1x4x32xf32>,
    %369 = vector.extract_strided_slice %340 {offsets = [0, 0], sizes = [4, 32], strides = [1, 1]} : vector<8x32xf32> to vector<4x32xf32>
    %c1_71 = arith.constant 1 : index
    %c0_72 = arith.constant 0 : index
    %c0_73 = arith.constant 0 : index
    %370 = vector.load %arg8[%c1_71, %c0_72, %c0_73] : memref<2x4x32xf32, #tpu.memory_space<vmem>>, vector<1x4x32xf32>
    %371 = vector.shape_cast %370 : vector<1x4x32xf32> to vector<4x32xf32>
    %372 = vector.shape_cast %369 : vector<4x32xf32> to vector<1x4x32xf32>
    tpu.vector_store %arg8[%c1_71, %c0_72, %c0_73], %372 {strides = array<i32>} : memref<2x4x32xf32, #tpu.memory_space<vmem>>, vector<1x4x32xf32>,
    return
  }
}

</mosaic_0001>

<llo_original>
// kernel: text_generation_forward.1
$region0: #{text_generation_forward.1}
  #allocation0 [shape = 'u32[]', space=smem, size = 0x4, offset = 0x4, fixed_abs, tag = 'smem constant byte address 0x4 - core index']
  #allocation1 [shape = 'u32[72,128]{1,0:T(1,128)}', space=vmem, size = 0x9000, scoped, tag = 'internal scratch']
  #allocation2 [shape = 'f32[8,8,32]{2,1,0:T(8,128)}', space=vmem, size = 0x8000, scoped, tag = 'scratch operand']
  %s0 = inlined_call_operand.vmem [shape: bf16[64,32], index: 0, kind: input, shape index: {}]
  %s1 = inlined_call_operand.vmem [shape: bf16[32,128], index: 1, kind: input, shape index: {}]
  %s2 = inlined_call_operand.vmem [shape: bf16[64,256], index: 2, kind: input, shape index: {}]
  %s3 = inlined_call_operand.vmem [shape: f32[1,256], index: 3, kind: input, shape index: {}]
  %s4 = inlined_call_operand.vmem [shape: bf16[32,32], index: 4, kind: input, shape index: {}]
  %s5 = inlined_call_operand.vmem [shape: f32[1,32], index: 5, kind: input, shape index: {}]
  %s6 = inlined_call_operand.hbm [shape: f32[4,8,32], index: 6, kind: output, shape index: {0}]
  %s7 = inlined_call_operand.hbm [shape: f32[2,4,32], index: 7, kind: output, shape index: {1}]
  %s8 = inlined_call_operand.hbm [shape: f32[2,4,32], index: 8, kind: output, shape index: {2}]
  %9 = xla_tuple %s6, %s7, %s8
  %s10 = sld [smem:[#allocation0]]
  $region50: #{text_generation_forward.1} parent=0
    _
  %s12 = ssub.s32 1, %s10
  %s13 = scalar_select 0, %s12, %s10
  $region1: #{text_generation_forward.1} parent=0
    #allocation3 [shape = 'u8[16384]{0}', space=vmem, size = 0x4000, scoped, tag = 'output window, operand 0, single buffered']
    #allocation4 [shape = 's32[1]{0}', space=sflag, size = 0x4, scoped, tag = 'scoped memory for text_generation_forward.1']
    #allocation5 [shape = 'u8[4096]{0}', space=vmem, size = 0x1000, scoped, tag = 'output window, operand 1, single buffered']
    #allocation6 [shape = 's32[1]{0}', space=sflag, size = 0x4, scoped, tag = 'scoped memory for text_generation_forward.1']
    #allocation7 [shape = 'u8[4096]{0}', space=vmem, size = 0x1000, scoped, tag = 'output window, operand 2, single buffered']
    %14 = vsyncpa [#allocation4], 0
    %15 = vsyncpa [#allocation6], 0
    // Predicated region
    $region2: #{text_generation_forward.1} parent=1 // pred_check
      _
    $region3: #{text_generation_forward.1} parent=1 // pred_check_branch
      %17 = sbr.rel (0) target = $region5
    $region4: #{text_generation_forward.1} parent=1 // pred_region
      _
    $region5: #{text_generation_forward.1} parent=1 // pred_fallthru
      _
    // Predicated region
    $region6: #{text_generation_forward.1} parent=1 // pred_check
      _
    $region7: #{text_generation_forward.1} parent=1 // pred_check_branch
      %19 = sbr.rel (0) target = $region9
    $region8: #{text_generation_forward.1} parent=1 // pred_region
      _
    $region9: #{text_generation_forward.1} parent=1 // pred_fallthru
      _
    // Predicated region
    $region10: #{text_generation_forward.1} parent=1 // pred_check
      _
    $region11: #{text_generation_forward.1} parent=1 // pred_check_branch
      %21 = sbr.rel (0) target = $region13
    $region12: #{text_generation_forward.1} parent=1 // pred_region
      _
    $region13: #{text_generation_forward.1} parent=1 // pred_fallthru
      _
    // Predicated region
    $region14: #{text_generation_forward.1} parent=1 // pred_check
      _
    $region15: #{text_generation_forward.1} parent=1 // pred_check_branch
      %23 = sbr.rel (0) target = $region17
    $region16: #{text_generation_forward.1} parent=1 // pred_region
      _
    $region17: #{text_generation_forward.1} parent=1 // pred_fallthru
      _
    // Predicated region
    $region18: #{text_generation_forward.1} parent=1 // pred_check
      _
    $region19: #{text_generation_forward.1} parent=1 // pred_check_branch
      %25 = sbr.rel (0) target = $region21
    $region20: #{text_generation_forward.1} parent=1 // pred_region
      _
    $region21: #{text_generation_forward.1} parent=1 // pred_fallthru
      _
    // Predicated region
    $region22: #{text_generation_forward.1} parent=1 // pred_check
      _
    $region23: #{text_generation_forward.1} parent=1 // pred_check_branch
      %27 = sbr.rel (0) target = $region25
    $region24: #{text_generation_forward.1} parent=1 // pred_region
      _
    $region25: #{text_generation_forward.1} parent=1 // pred_fallthru
      _
    %v29 = vld [vmem:[%s2] sm:$0xff]
    %v30 = vld [vmem:[%s2 + $0x8] sm:$0xff]
    %v31 = vld [vmem:[%s2 + $0x10] sm:$0xff]
    %v32 = vld [vmem:[%s2 + $0x18] sm:$0xff]
    %v33 = vld [vmem:[%s2 + $0x20] sm:$0xff]
    %v34 = vld [vmem:[%s2 + $0x28] sm:$0xff]
    %v35 = vld [vmem:[%s2 + $0x30] sm:$0xff]
    %v36 = vld [vmem:[%s2 + $0x38] sm:$0xff]
    %v37 = vld [vmem:[%s3] sm:$0x3]
    %v38 = vld [vmem:[%s0] sm:$0xf]
    %v39 = vld [vmem:[%s0 + $0x4] sm:$0xf]
    %v40 = vld [vmem:[%s0 + $0x8] sm:$0xf]
    %v41 = vld [vmem:[%s0 + $0xc] sm:$0xf]
    %v42 = vld [vmem:[%s0 + $0x10] sm:$0xf]
    %v43 = vld [vmem:[%s0 + $0x14] sm:$0xf]
    %v44 = vld [vmem:[%s0 + $0x18] sm:$0xf]
    %v45 = vld [vmem:[%s0 + $0x1c] sm:$0xf]
    %v46 = vld [vmem:[%s1] sm:$0xf]
    %v47 = vld [vmem:[%s1 + $0x4] sm:$0xf]
    %v48 = vld [vmem:[%s1 + $0x8] sm:$0xf]
    %v49 = vld [vmem:[%s1 + $0xc] sm:$0xf]
    %v58 = vunpack.c.l.b16 %v38
    %v59 = vunpack.c.l.b16 %v39
    %v60 = vunpack.c.l.b16 %v40
    %v61 = vunpack.c.l.b16 %v41
    %v62 = vunpack.c.l.b16 %v42
    %v63 = vunpack.c.l.b16 %v43
    %v64 = vunpack.c.l.b16 %v44
    %v65 = vunpack.c.l.b16 %v45
    %v66 = vpack.c.b16 %v59, %v58
    %v67 = vpack.c.b16 %v61, %v60
    %v68 = vpack.c.b16 %v63, %v62
    %v69 = vpack.c.b16 %v65, %v64
    %v74 = vunpack.c.l.b16 %v46
    %v75 = vunpack.c.l.b16 %v47
    %v76 = vunpack.c.l.b16 %v48
    %v77 = vunpack.c.l.b16 %v49
    %v78 = vpack.c.b16 %v75, %v74
    %v79 = vpack.c.b16 %v77, %v76
    %vm82 = vcmask 261120
    %v84 = vsel %vm82, %v66, 0
    %v87 = vsel %vm82, %v67, 0
    %v90 = vsel %vm82, %v68, 0
    %v93 = vsel %vm82, %v69, 0
    %95 = vmatpush.bf16.msra.mxu0 0
    %96 = vmatpush.bf16.msra.mxu0 0
    %97 = vmatpush.bf16.msra.mxu0 0
    %98 = vmatpush.bf16.msra.mxu0 0
    %99 = vmatpush.bf16.msra.mxu0 0
    %100 = vmatpush.bf16.msra.mxu0 0
    %101 = vmatpush.bf16.msra.mxu0 %v79
    %102 = vmatpush.bf16.msra.mxu0 %v78
    %103 = vmatmul.bf16.gmra.mxu0 %v84
    %v104 = vpop.f32.mrf.mxu0
    %v105 = vadd.f32 0.0, %v104
    %v106 = vpop.f32.mrf.mxu0
    %v107 = vadd.f32 0.0, %v106
    %108 = vmatmul.bf16.gmra.mxu0 %v87
    %v109 = vpop.f32.mrf.mxu0
    %v110 = vadd.f32 0.0, %v109
    %v111 = vpop.f32.mrf.mxu0
    %v112 = vadd.f32 0.0, %v111
    %113 = vmatmul.bf16.gmra.mxu0 %v90
    %v114 = vpop.f32.mrf.mxu0
    %v115 = vadd.f32 0.0, %v114
    %v116 = vpop.f32.mrf.mxu0
    %v117 = vadd.f32 0.0, %v116
    %118 = vmatmul.bf16.gmra.mxu0 %v93
    %v119 = vpop.f32.mrf.mxu0
    %v120 = vadd.f32 0.0, %v119
    %v121 = vpop.f32.mrf.mxu0
    %v122 = vadd.f32 0.0, %v121
    %123 = vdwg.mxu0
    %v125 = vperm.slane %v37, 0
    %v127 = vadd.f32 %v125, %v105
    %v128 = vxor.u32 %v127, 2147483648
    %v129 = vmul.f32 %v128, 1.442695
    %v130 = vpow.pop %v129
    %v131 = vadd.f32 %v130, 1.0
    %v132 = vrcp.pop %v131
    %v133 = vmul.f32 %v131, %v132
    %v134 = vsub.f32 1.0, %v133
    %v135 = vmul.f32 %v132, %v134
    %v136 = vadd.f32 %v132, %v135
    %vm137 = vweird.f32 %v131
    %vm138 = vweird.f32 %v132
    %vm139 = vmor %vm137, %vm138
    %v140 = vsel %vm139, %v132, %v136
    %v141 = vand.u32 2147483647, %v131
    %vm142 = vcmp.eq.f32.partialorder %v141, 8.507059e+37
    %v143 = vand.u32 %v131, 2147483648
    %v144 = vor.u32 1.1754944e-38, %v143
    %v145 = vsel %vm142, %v144, %v140
    %v146 = vmul.f32 1.0, %v145
    %v147 = vtanh.pop %v127
    %v148 = vmul.f32 %v146, 0.0
    %150 = vrot.lane.b32.xlu0 %v147, 64
    %v151 = vpop.permute.xlu0 %150
    %v153 = vmul.f32 %v146, %v151
    %155 = vrot.lane.b32.xlu0 %v153, 32
    %v156 = vpop.permute.xlu0 %155
    %v158 = vadd.f32 %v148, %v156
    %v159 = vtanh.pop %v158
    %161 = vrot.lane.b32.xlu0 %v159, 64
    %v162 = vpop.permute.xlu0 %161
    %v164 = vmul.f32 %v146, %v162
    %166 = vrot.lane.b32.xlu0 %v164, 32
    %v167 = vpop.permute.xlu0 %166
    %v169 = vsel %vm82, %v167, 0.0
    %v170 = vpack.c.bf16 %v169, %v169
    %v171 = vperm.slane %v37, 1
    %v181 = vunpack.c.l.b16 %v29
    %v182 = vunpack.c.h.b16 %v29
    %v183 = vunpack.c.l.b16 %v30
    %v184 = vunpack.c.h.b16 %v30
    %v185 = vunpack.c.l.b16 %v31
    %v186 = vunpack.c.h.b16 %v31
    %v187 = vunpack.c.l.b16 %v32
    %v188 = vunpack.c.h.b16 %v32
    %v189 = vunpack.c.l.b16 %v33
    %v190 = vunpack.c.h.b16 %v33
    %v191 = vunpack.c.l.b16 %v34
    %v192 = vunpack.c.h.b16 %v34
    %v193 = vunpack.c.l.b16 %v35
    %v194 = vunpack.c.h.b16 %v35
    %v195 = vunpack.c.l.b16 %v36
    %v196 = vunpack.c.h.b16 %v36
    %v197 = vpack.c.b16 %v183, %v181
    %v198 = vpack.c.b16 %v184, %v182
    %v199 = vpack.c.b16 %v187, %v185
    %v200 = vpack.c.b16 %v188, %v186
    %v201 = vpack.c.b16 %v191, %v189
    %v202 = vpack.c.b16 %v192, %v190
    %v203 = vpack.c.b16 %v195, %v193
    %v204 = vpack.c.b16 %v196, %v194
    %vm213 = vcmask 523264
    %v215 = vsel %vm213, %v170, 0
    %217 = vmatpush.bf16.msra.mxu0 0
    %218 = vmatpush.bf16.msra.mxu0 0
    %219 = vmatpush.bf16.msra.mxu0 0
    %220 = vmatpush.bf16.msra.mxu0 0
    %221 = vmatpush.bf16.msra.mxu0 %v203
    %222 = vmatpush.bf16.msra.mxu0 %v201
    %223 = vmatpush.bf16.msra.mxu0 %v199
    %224 = vmatpush.bf16.msra.mxu0 %v197
    %225 = vmatmul.bf16.gmra.mxu0 %v215
    %v226 = vpop.f32.mrf.mxu0
    %v227 = vadd.f32 %v125, %v226
    %v228 = vpop.f32.mrf.mxu0
    %229 = vdwg.mxu0
    %230 = vmatpush.bf16.msra.mxu0 0
    %231 = vmatpush.bf16.msra.mxu0 0
    %232 = vmatpush.bf16.msra.mxu0 0
    %233 = vmatpush.bf16.msra.mxu0 0
    %234 = vmatpush.bf16.msra.mxu0 %v204
    %235 = vmatpush.bf16.msra.mxu0 %v202
    %236 = vmatpush.bf16.msra.mxu0 %v200
    %237 = vmatpush.bf16.msra.mxu0 %v198
    %238 = vmatmul.bf16.gmra.mxu0 %v215
    %v239 = vpop.f32.mrf.mxu0
    %v240 = vadd.f32 %v171, %v239
    %v241 = vpop.f32.mrf.mxu0
    %242 = vdwg.mxu0
    %v243 = vadd.f32 %v227, %v107
    %v244 = vxor.u32 %v243, 2147483648
    %v245 = vmul.f32 %v244, 1.442695
    %v246 = vpow.pop %v245
    %v247 = vadd.f32 %v246, 1.0
    %v248 = vrcp.pop %v247
    %v249 = vmul.f32 %v247, %v248
    %v250 = vsub.f32 1.0, %v249
    %v251 = vmul.f32 %v248, %v250
    %v252 = vadd.f32 %v248, %v251
    %vm253 = vweird.f32 %v247
    %vm254 = vweird.f32 %v248
    %vm255 = vmor %vm253, %vm254
    %v256 = vsel %vm255, %v248, %v252
    %v257 = vand.u32 2147483647, %v247
    %vm258 = vcmp.eq.f32.partialorder %v257, 8.507059e+37
    %v259 = vand.u32 %v247, 2147483648
    %v260 = vor.u32 1.1754944e-38, %v259
    %v261 = vsel %vm258, %v260, %v256
    %v262 = vmul.f32 1.0, %v261
    %v263 = vtanh.pop %v243
    %v264 = vmul.f32 %v262, %v158
    %266 = vrot.lane.b32.xlu0 %v263, 64
    %v267 = vpop.permute.xlu0 %266
    %v269 = vmul.f32 %v262, %v267
    %271 = vrot.lane.b32.xlu0 %v269, 32
    %v272 = vpop.permute.xlu0 %271
    %v274 = vadd.f32 %v264, %v272
    %v275 = vtanh.pop %v274
    %277 = vrot.lane.b32.xlu0 %v275, 64
    %v278 = vpop.permute.xlu0 %277
    %v280 = vmul.f32 %v262, %v278
    %v281 = vxor.u32 %v240, 2147483648
    %v282 = vmul.f32 %v281, 1.442695
    %v283 = vpow.pop %v282
    %v284 = vadd.f32 %v283, 1.0
    %v285 = vrcp.pop %v284
    %v286 = vmul.f32 %v284, %v285
    %v287 = vsub.f32 1.0, %v286
    %v288 = vmul.f32 %v285, %v287
    %v289 = vadd.f32 %v285, %v288
    %vm290 = vweird.f32 %v284
    %vm291 = vweird.f32 %v285
    %vm292 = vmor %vm290, %vm291
    %v293 = vsel %vm292, %v285, %v289
    %v294 = vand.u32 2147483647, %v284
    %vm295 = vcmp.eq.f32.partialorder %v294, 8.507059e+37
    %v296 = vand.u32 %v284, 2147483648
    %v297 = vor.u32 1.1754944e-38, %v296
    %v298 = vsel %vm295, %v297, %v293
    %v299 = vmul.f32 1.0, %v298
    %v300 = vtanh.pop %v240
    %v301 = vmul.f32 %v299, 0.0
    %303 = vrot.lane.b32.xlu0 %v300, 64
    %v304 = vpop.permute.xlu0 %303
    %v306 = vmul.f32 %v299, %v304
    %308 = vrot.lane.b32.xlu0 %v306, 32
    %v309 = vpop.permute.xlu0 %308
    %v311 = vadd.f32 %v301, %v309
    %v312 = vtanh.pop %v311
    %314 = vrot.lane.b32.xlu0 %v312, 64
    %v315 = vpop.permute.xlu0 %314
    %v317 = vmul.f32 %v299, %v315
    %v319 = vrot.slane %v317, 1
    %v320 = vrot.slane %v317, 2
    %v321 = vrot.slane %v317, 3
    %v322 = vrot.slane %v317, 4
    %v323 = vrot.slane %v317, 5
    %v324 = vrot.slane %v317, 6
    %v325 = vrot.slane %v317, 7
    %v326 = vperm.slane %v317, 0
    %v327 = vperm.slane %v319, 0
    %v328 = vperm.slane %v320, 0
    %v329 = vperm.slane %v321, 0
    %v330 = vperm.slane %v322, 0
    %v331 = vperm.slane %v323, 0
    %v332 = vperm.slane %v324, 0
    %v333 = vperm.slane %v325, 0
    %334 = vrot.lane.b32.xlu0 %v326, 32
    %v335 = vpop.permute.xlu0 %334
    %336 = vrot.lane.b32.xlu0 %v327, 32
    %v337 = vpop.permute.xlu0 %336
    %338 = vrot.lane.b32.xlu0 %v328, 32
    %v339 = vpop.permute.xlu0 %338
    %340 = vrot.lane.b32.xlu0 %v329, 32
    %v341 = vpop.permute.xlu0 %340
    %342 = vrot.lane.b32.xlu0 %v330, 32
    %v343 = vpop.permute.xlu0 %342
    %344 = vrot.lane.b32.xlu0 %v331, 32
    %v345 = vpop.permute.xlu0 %344
    %346 = vrot.lane.b32.xlu0 %v332, 32
    %v347 = vpop.permute.xlu0 %346
    %348 = vrot.lane.b32.xlu0 %v333, 32
    %v349 = vpop.permute.xlu0 %348
    %vm358 = vcmask 253952
    %359 = vst.msk [vmem:[#allocation2] sm:$0x1] %vm358, %v335
    %360 = vst.msk [vmem:[#allocation2 + $0x8] sm:$0x1] %vm358, %v337
    %361 = vst.msk [vmem:[#allocation2 + $0x10] sm:$0x1] %vm358, %v339
    %362 = vst.msk [vmem:[#allocation2 + $0x18] sm:$0x1] %vm358, %v341
    %363 = vst.msk [vmem:[#allocation2 + $0x20] sm:$0x1] %vm358, %v343
    %364 = vst.msk [vmem:[#allocation2 + $0x28] sm:$0x1] %vm358, %v345
    %365 = vst.msk [vmem:[#allocation2 + $0x30] sm:$0x1] %vm358, %v347
    %366 = vst.msk [vmem:[#allocation2 + $0x38] sm:$0x1] %vm358, %v349
    %368 = vrot.lane.b32.xlu0 %v280, 32
    %v369 = vpop.permute.xlu0 %368
    %371 = vrot.lane.b32.xlu0 %v317, 64
    %v372 = vpop.permute.xlu0 %371
    %v374 = vsel %vm82, %v369, %v372
    %v375 = vpack.c.bf16 %v374, %v374
    %v377 = vsel %vm213, %v375, 0
    %379 = vmatpush.bf16.msra.mxu0 0
    %380 = vmatpush.bf16.msra.mxu0 0
    %381 = vmatpush.bf16.msra.mxu0 0
    %382 = vmatpush.bf16.msra.mxu0 0
    %383 = vmatpush.bf16.msra.mxu0 %v203
    %384 = vmatpush.bf16.msra.mxu0 %v201
    %385 = vmatpush.bf16.msra.mxu0 %v199
    %386 = vmatpush.bf16.msra.mxu0 %v197
    %387 = vmatmul.bf16.gmra.mxu0 %v377
    %v388 = vpop.f32.mrf.mxu0
    %v389 = vadd.f32 %v125, %v388
    %v390 = vpop.f32.mrf.mxu0
    %391 = vdwg.mxu0
    %392 = vmatpush.bf16.msra.mxu0 0
    %393 = vmatpush.bf16.msra.mxu0 0
    %394 = vmatpush.bf16.msra.mxu0 0
    %395 = vmatpush.bf16.msra.mxu0 0
    %396 = vmatpush.bf16.msra.mxu0 %v204
    %397 = vmatpush.bf16.msra.mxu0 %v202
    %398 = vmatpush.bf16.msra.mxu0 %v200
    %399 = vmatpush.bf16.msra.mxu0 %v198
    %400 = vmatmul.bf16.gmra.mxu0 %v377
    %v401 = vpop.f32.mrf.mxu0
    %v402 = vadd.f32 %v171, %v401
    %v403 = vpop.f32.mrf.mxu0
    %404 = vdwg.mxu0
    %v405 = vadd.f32 %v389, %v110
    %v406 = vxor.u32 %v405, 2147483648
    %v407 = vmul.f32 %v406, 1.442695
    %v408 = vpow.pop %v407
    %v409 = vadd.f32 %v408, 1.0
    %v410 = vrcp.pop %v409
    %v411 = vmul.f32 %v409, %v410
    %v412 = vsub.f32 1.0, %v411
    %v413 = vmul.f32 %v410, %v412
    %v414 = vadd.f32 %v410, %v413
    %vm415 = vweird.f32 %v409
    %vm416 = vweird.f32 %v410
    %vm417 = vmor %vm415, %vm416
    %v418 = vsel %vm417, %v410, %v414
    %v419 = vand.u32 2147483647, %v409
    %vm420 = vcmp.eq.f32.partialorder %v419, 8.507059e+37
    %v421 = vand.u32 %v409, 2147483648
    %v422 = vor.u32 1.1754944e-38, %v421
    %v423 = vsel %vm420, %v422, %v418
    %v424 = vmul.f32 1.0, %v423
    %v425 = vtanh.pop %v405
    %v426 = vmul.f32 %v424, %v274
    %428 = vrot.lane.b32.xlu0 %v425, 64
    %v429 = vpop.permute.xlu0 %428
    %v431 = vmul.f32 %v424, %v429
    %433 = vrot.lane.b32.xlu0 %v431, 32
    %v434 = vpop.permute.xlu0 %433
    %v436 = vadd.f32 %v426, %v434
    %v437 = vtanh.pop %v436
    %439 = vrot.lane.b32.xlu0 %v437, 64
    %v440 = vpop.permute.xlu0 %439
    %v442 = vmul.f32 %v424, %v440
    %v443 = vxor.u32 %v402, 2147483648
    %v444 = vmul.f32 %v443, 1.442695
    %v445 = vpow.pop %v444
    %v446 = vadd.f32 %v445, 1.0
    %v447 = vrcp.pop %v446
    %v448 = vmul.f32 %v446, %v447
    %v449 = vsub.f32 1.0, %v448
    %v450 = vmul.f32 %v447, %v449
    %v451 = vadd.f32 %v447, %v450
    %vm452 = vweird.f32 %v446
    %vm453 = vweird.f32 %v447
    %vm454 = vmor %vm452, %vm453
    %v455 = vsel %vm454, %v447, %v451
    %v456 = vand.u32 2147483647, %v446
    %vm457 = vcmp.eq.f32.partialorder %v456, 8.507059e+37
    %v458 = vand.u32 %v446, 2147483648
    %v459 = vor.u32 1.1754944e-38, %v458
    %v460 = vsel %vm457, %v459, %v455
    %v461 = vmul.f32 1.0, %v460
    %v462 = vtanh.pop %v402
    %v463 = vmul.f32 %v461, %v311
    %465 = vrot.lane.b32.xlu0 %v462, 64
    %v466 = vpop.permute.xlu0 %465
    %v468 = vmul.f32 %v461, %v466
    %470 = vrot.lane.b32.xlu0 %v468, 32
    %v471 = vpop.permute.xlu0 %470
    %v473 = vadd.f32 %v463, %v471
    %v474 = vtanh.pop %v473
    %476 = vrot.lane.b32.xlu0 %v474, 64
    %v477 = vpop.permute.xlu0 %476
    %v479 = vmul.f32 %v461, %v477
    %v481 = vrot.slane %v479, 1
    %v482 = vrot.slane %v479, 2
    %v483 = vrot.slane %v479, 3
    %v484 = vrot.slane %v479, 4
    %v485 = vrot.slane %v479, 5
    %v486 = vrot.slane %v479, 6
    %v487 = vrot.slane %v479, 7
    %v488 = vperm.slane %v479, 0
    %v489 = vperm.slane %v481, 0
    %v490 = vperm.slane %v482, 0
    %v491 = vperm.slane %v483, 0
    %v492 = vperm.slane %v484, 0
    %v493 = vperm.slane %v485, 0
    %v494 = vperm.slane %v486, 0
    %v495 = vperm.slane %v487, 0
    %496 = vrot.lane.b32.xlu0 %v488, 32
    %v497 = vpop.permute.xlu0 %496
    %498 = vrot.lane.b32.xlu0 %v489, 32
    %v499 = vpop.permute.xlu0 %498
    %500 = vrot.lane.b32.xlu0 %v490, 32
    %v501 = vpop.permute.xlu0 %500
    %502 = vrot.lane.b32.xlu0 %v491, 32
    %v503 = vpop.permute.xlu0 %502
    %504 = vrot.lane.b32.xlu0 %v492, 32
    %v505 = vpop.permute.xlu0 %504
    %506 = vrot.lane.b32.xlu0 %v493, 32
    %v507 = vpop.permute.xlu0 %506
    %508 = vrot.lane.b32.xlu0 %v494, 32
    %v509 = vpop.permute.xlu0 %508
    %510 = vrot.lane.b32.xlu0 %v495, 32
    %v511 = vpop.permute.xlu0 %510
    %520 = vst.msk [vmem:[#allocation2 + $0x1] sm:$0x1] %vm358, %v497
    %521 = vst.msk [vmem:[#allocation2 + $0x9] sm:$0x1] %vm358, %v499
    %522 = vst.msk [vmem:[#allocation2 + $0x11] sm:$0x1] %vm358, %v501
    %523 = vst.msk [vmem:[#allocation2 + $0x19] sm:$0x1] %vm358, %v503
    %524 = vst.msk [vmem:[#allocation2 + $0x21] sm:$0x1] %vm358, %v505
    %525 = vst.msk [vmem:[#allocation2 + $0x29] sm:$0x1] %vm358, %v507
    %526 = vst.msk [vmem:[#allocation2 + $0x31] sm:$0x1] %vm358, %v509
    %527 = vst.msk [vmem:[#allocation2 + $0x39] sm:$0x1] %vm358, %v511
    %529 = vrot.lane.b32.xlu0 %v442, 32
    %v530 = vpop.permute.xlu0 %529
    %532 = vrot.lane.b32.xlu0 %v479, 64
    %v533 = vpop.permute.xlu0 %532
    %v535 = vsel %vm82, %v530, %v533
    %v536 = vpack.c.bf16 %v535, %v535
    %v538 = vsel %vm213, %v536, 0
    %540 = vmatpush.bf16.msra.mxu0 0
    %541 = vmatpush.bf16.msra.mxu0 0
    %542 = vmatpush.bf16.msra.mxu0 0
    %543 = vmatpush.bf16.msra.mxu0 0
    %544 = vmatpush.bf16.msra.mxu0 %v203
    %545 = vmatpush.bf16.msra.mxu0 %v201
    %546 = vmatpush.bf16.msra.mxu0 %v199
    %547 = vmatpush.bf16.msra.mxu0 %v197
    %548 = vmatmul.bf16.gmra.mxu0 %v538
    %v549 = vpop.f32.mrf.mxu0
    %v550 = vadd.f32 %v125, %v549
    %v551 = vpop.f32.mrf.mxu0
    %552 = vdwg.mxu0
    %553 = vmatpush.bf16.msra.mxu0 0
    %554 = vmatpush.bf16.msra.mxu0 0
    %555 = vmatpush.bf16.msra.mxu0 0
    %556 = vmatpush.bf16.msra.mxu0 0
    %557 = vmatpush.bf16.msra.mxu0 %v204
    %558 = vmatpush.bf16.msra.mxu0 %v202
    %559 = vmatpush.bf16.msra.mxu0 %v200
    %560 = vmatpush.bf16.msra.mxu0 %v198
    %561 = vmatmul.bf16.gmra.mxu0 %v538
    %v562 = vpop.f32.mrf.mxu0
    %v563 = vadd.f32 %v171, %v562
    %v564 = vpop.f32.mrf.mxu0
    %565 = vdwg.mxu0
    %v566 = vadd.f32 %v550, %v112
    %v567 = vxor.u32 %v566, 2147483648
    %v568 = vmul.f32 %v567, 1.442695
    %v569 = vpow.pop %v568
    %v570 = vadd.f32 %v569, 1.0
    %v571 = vrcp.pop %v570
    %v572 = vmul.f32 %v570, %v571
    %v573 = vsub.f32 1.0, %v572
    %v574 = vmul.f32 %v571, %v573
    %v575 = vadd.f32 %v571, %v574
    %vm576 = vweird.f32 %v570
    %vm577 = vweird.f32 %v571
    %vm578 = vmor %vm576, %vm577
    %v579 = vsel %vm578, %v571, %v575
    %v580 = vand.u32 2147483647, %v570
    %vm581 = vcmp.eq.f32.partialorder %v580, 8.507059e+37
    %v582 = vand.u32 %v570, 2147483648
    %v583 = vor.u32 1.1754944e-38, %v582
    %v584 = vsel %vm581, %v583, %v579
    %v585 = vmul.f32 1.0, %v584
    %v586 = vtanh.pop %v566
    %v587 = vmul.f32 %v585, %v436
    %589 = vrot.lane.b32.xlu0 %v586, 64
    %v590 = vpop.permute.xlu0 %589
    %v592 = vmul.f32 %v585, %v590
    %594 = vrot.lane.b32.xlu0 %v592, 32
    %v595 = vpop.permute.xlu0 %594
    %v597 = vadd.f32 %v587, %v595
    %v598 = vtanh.pop %v597
    %600 = vrot.lane.b32.xlu0 %v598, 64
    %v601 = vpop.permute.xlu0 %600
    %v603 = vmul.f32 %v585, %v601
    %v604 = vxor.u32 %v563, 2147483648
    %v605 = vmul.f32 %v604, 1.442695
    %v606 = vpow.pop %v605
    %v607 = vadd.f32 %v606, 1.0
    %v608 = vrcp.pop %v607
    %v609 = vmul.f32 %v607, %v608
    %v610 = vsub.f32 1.0, %v609
    %v611 = vmul.f32 %v608, %v610
    %v612 = vadd.f32 %v608, %v611
    %vm613 = vweird.f32 %v607
    %vm614 = vweird.f32 %v608
    %vm615 = vmor %vm613, %vm614
    %v616 = vsel %vm615, %v608, %v612
    %v617 = vand.u32 2147483647, %v607
    %vm618 = vcmp.eq.f32.partialorder %v617, 8.507059e+37
    %v619 = vand.u32 %v607, 2147483648
    %v620 = vor.u32 1.1754944e-38, %v619
    %v621 = vsel %vm618, %v620, %v616
    %v622 = vmul.f32 1.0, %v621
    %v623 = vtanh.pop %v563
    %v624 = vmul.f32 %v622, %v473
    %626 = vrot.lane.b32.xlu0 %v623, 64
    %v627 = vpop.permute.xlu0 %626
    %v629 = vmul.f32 %v622, %v627
    %631 = vrot.lane.b32.xlu0 %v629, 32
    %v632 = vpop.permute.xlu0 %631
    %v634 = vadd.f32 %v624, %v632
    %v635 = vtanh.pop %v634
    %637 = vrot.lane.b32.xlu0 %v635, 64
    %v638 = vpop.permute.xlu0 %637
    %v640 = vmul.f32 %v622, %v638
    %v642 = vrot.slane %v640, 1
    %v643 = vrot.slane %v640, 2
    %v644 = vrot.slane %v640, 3
    %v645 = vrot.slane %v640, 4
    %v646 = vrot.slane %v640, 5
    %v647 = vrot.slane %v640, 6
    %v648 = vrot.slane %v640, 7
    %v649 = vperm.slane %v640, 0
    %v650 = vperm.slane %v642, 0
    %v651 = vperm.slane %v643, 0
    %v652 = vperm.slane %v644, 0
    %v653 = vperm.slane %v645, 0
    %v654 = vperm.slane %v646, 0
    %v655 = vperm.slane %v647, 0
    %v656 = vperm.slane %v648, 0
    %657 = vrot.lane.b32.xlu0 %v649, 32
    %v658 = vpop.permute.xlu0 %657
    %659 = vrot.lane.b32.xlu0 %v650, 32
    %v660 = vpop.permute.xlu0 %659
    %661 = vrot.lane.b32.xlu0 %v651, 32
    %v662 = vpop.permute.xlu0 %661
    %663 = vrot.lane.b32.xlu0 %v652, 32
    %v664 = vpop.permute.xlu0 %663
    %665 = vrot.lane.b32.xlu0 %v653, 32
    %v666 = vpop.permute.xlu0 %665
    %667 = vrot.lane.b32.xlu0 %v654, 32
    %v668 = vpop.permute.xlu0 %667
    %669 = vrot.lane.b32.xlu0 %v655, 32
    %v670 = vpop.permute.xlu0 %669
    %671 = vrot.lane.b32.xlu0 %v656, 32
    %v672 = vpop.permute.xlu0 %671
    %681 = vst.msk [vmem:[#allocation2 + $0x2] sm:$0x1] %vm358, %v658
    %682 = vst.msk [vmem:[#allocation2 + $0xa] sm:$0x1] %vm358, %v660
    %683 = vst.msk [vmem:[#allocation2 + $0x12] sm:$0x1] %vm358, %v662
    %684 = vst.msk [vmem:[#allocation2 + $0x1a] sm:$0x1] %vm358, %v664
    %685 = vst.msk [vmem:[#allocation2 + $0x22] sm:$0x1] %vm358, %v666
    %686 = vst.msk [vmem:[#allocation2 + $0x2a] sm:$0x1] %vm358, %v668
    %687 = vst.msk [vmem:[#allocation2 + $0x32] sm:$0x1] %vm358, %v670
    %688 = vst.msk [vmem:[#allocation2 + $0x3a] sm:$0x1] %vm358, %v672
    %690 = vrot.lane.b32.xlu0 %v603, 32
    %v691 = vpop.permute.xlu0 %690
    %693 = vrot.lane.b32.xlu0 %v640, 64
    %v694 = vpop.permute.xlu0 %693
    %v696 = vsel %vm82, %v691, %v694
    %v697 = vpack.c.bf16 %v696, %v696
    %v699 = vsel %vm213, %v697, 0
    %701 = vmatpush.bf16.msra.mxu0 0
    %702 = vmatpush.bf16.msra.mxu0 0
    %703 = vmatpush.bf16.msra.mxu0 0
    %704 = vmatpush.bf16.msra.mxu0 0
    %705 = vmatpush.bf16.msra.mxu0 %v203
    %706 = vmatpush.bf16.msra.mxu0 %v201
    %707 = vmatpush.bf16.msra.mxu0 %v199
    %708 = vmatpush.bf16.msra.mxu0 %v197
    %709 = vmatmul.bf16.gmra.mxu0 %v699
    %v710 = vpop.f32.mrf.mxu0
    %v711 = vadd.f32 %v125, %v710
    %v712 = vpop.f32.mrf.mxu0
    %713 = vdwg.mxu0
    %714 = vmatpush.bf16.msra.mxu0 0
    %715 = vmatpush.bf16.msra.mxu0 0
    %716 = vmatpush.bf16.msra.mxu0 0
    %717 = vmatpush.bf16.msra.mxu0 0
    %718 = vmatpush.bf16.msra.mxu0 %v204
    %719 = vmatpush.bf16.msra.mxu0 %v202
    %720 = vmatpush.bf16.msra.mxu0 %v200
    %721 = vmatpush.bf16.msra.mxu0 %v198
    %722 = vmatmul.bf16.gmra.mxu0 %v699
    %v723 = vpop.f32.mrf.mxu0
    %v724 = vadd.f32 %v171, %v723
    %v725 = vpop.f32.mrf.mxu0
    %726 = vdwg.mxu0
    %v727 = vadd.f32 %v711, %v115
    %v728 = vxor.u32 %v727, 2147483648
    %v729 = vmul.f32 %v728, 1.442695
    %v730 = vpow.pop %v729
    %v731 = vadd.f32 %v730, 1.0
    %v732 = vrcp.pop %v731
    %v733 = vmul.f32 %v731, %v732
    %v734 = vsub.f32 1.0, %v733
    %v735 = vmul.f32 %v732, %v734
    %v736 = vadd.f32 %v732, %v735
    %vm737 = vweird.f32 %v731
    %vm738 = vweird.f32 %v732
    %vm739 = vmor %vm737, %vm738
    %v740 = vsel %vm739, %v732, %v736
    %v741 = vand.u32 2147483647, %v731
    %vm742 = vcmp.eq.f32.partialorder %v741, 8.507059e+37
    %v743 = vand.u32 %v731, 2147483648
    %v744 = vor.u32 1.1754944e-38, %v743
    %v745 = vsel %vm742, %v744, %v740
    %v746 = vmul.f32 1.0, %v745
    %v747 = vtanh.pop %v727
    %v748 = vmul.f32 %v746, %v597
    %750 = vrot.lane.b32.xlu0 %v747, 64
    %v751 = vpop.permute.xlu0 %750
    %v753 = vmul.f32 %v746, %v751
    %755 = vrot.lane.b32.xlu0 %v753, 32
    %v756 = vpop.permute.xlu0 %755
    %v758 = vadd.f32 %v748, %v756
    %v759 = vtanh.pop %v758
    %761 = vrot.lane.b32.xlu0 %v759, 64
    %v762 = vpop.permute.xlu0 %761
    %v764 = vmul.f32 %v746, %v762
    %v765 = vxor.u32 %v724, 2147483648
    %v766 = vmul.f32 %v765, 1.442695
    %v767 = vpow.pop %v766
    %v768 = vadd.f32 %v767, 1.0
    %v769 = vrcp.pop %v768
    %v770 = vmul.f32 %v768, %v769
    %v771 = vsub.f32 1.0, %v770
    %v772 = vmul.f32 %v769, %v771
    %v773 = vadd.f32 %v769, %v772
    %vm774 = vweird.f32 %v768
    %vm775 = vweird.f32 %v769
    %vm776 = vmor %vm774, %vm775
    %v777 = vsel %vm776, %v769, %v773
    %v778 = vand.u32 2147483647, %v768
    %vm779 = vcmp.eq.f32.partialorder %v778, 8.507059e+37
    %v780 = vand.u32 %v768, 2147483648
    %v781 = vor.u32 1.1754944e-38, %v780
    %v782 = vsel %vm779, %v781, %v777
    %v783 = vmul.f32 1.0, %v782
    %v784 = vtanh.pop %v724
    %v785 = vmul.f32 %v783, %v634
    %787 = vrot.lane.b32.xlu0 %v784, 64
    %v788 = vpop.permute.xlu0 %787
    %v790 = vmul.f32 %v783, %v788
    %792 = vrot.lane.b32.xlu0 %v790, 32
    %v793 = vpop.permute.xlu0 %792
    %v795 = vadd.f32 %v785, %v793
    %v796 = vtanh.pop %v795
    %798 = vrot.lane.b32.xlu0 %v796, 64
    %v799 = vpop.permute.xlu0 %798
    %v801 = vmul.f32 %v783, %v799
    %v803 = vrot.slane %v801, 1
    %v804 = vrot.slane %v801, 2
    %v805 = vrot.slane %v801, 3
    %v806 = vrot.slane %v801, 4
    %v807 = vrot.slane %v801, 5
    %v808 = vrot.slane %v801, 6
    %v809 = vrot.slane %v801, 7
    %v810 = vperm.slane %v801, 0
    %v811 = vperm.slane %v803, 0
    %v812 = vperm.slane %v804, 0
    %v813 = vperm.slane %v805, 0
    %v814 = vperm.slane %v806, 0
    %v815 = vperm.slane %v807, 0
    %v816 = vperm.slane %v808, 0
    %v817 = vperm.slane %v809, 0
    %818 = vrot.lane.b32.xlu0 %v810, 32
    %v819 = vpop.permute.xlu0 %818
    %820 = vrot.lane.b32.xlu0 %v811, 32
    %v821 = vpop.permute.xlu0 %820
    %822 = vrot.lane.b32.xlu0 %v812, 32
    %v823 = vpop.permute.xlu0 %822
    %824 = vrot.lane.b32.xlu0 %v813, 32
    %v825 = vpop.permute.xlu0 %824
    %826 = vrot.lane.b32.xlu0 %v814, 32
    %v827 = vpop.permute.xlu0 %826
    %828 = vrot.lane.b32.xlu0 %v815, 32
    %v829 = vpop.permute.xlu0 %828
    %830 = vrot.lane.b32.xlu0 %v816, 32
    %v831 = vpop.permute.xlu0 %830
    %832 = vrot.lane.b32.xlu0 %v817, 32
    %v833 = vpop.permute.xlu0 %832
    %842 = vst.msk [vmem:[#allocation2 + $0x3] sm:$0x1] %vm358, %v819
    %843 = vst.msk [vmem:[#allocation2 + $0xb] sm:$0x1] %vm358, %v821
    %844 = vst.msk [vmem:[#allocation2 + $0x13] sm:$0x1] %vm358, %v823
    %845 = vst.msk [vmem:[#allocation2 + $0x1b] sm:$0x1] %vm358, %v825
    %846 = vst.msk [vmem:[#allocation2 + $0x23] sm:$0x1] %vm358, %v827
    %847 = vst.msk [vmem:[#allocation2 + $0x2b] sm:$0x1] %vm358, %v829
    %848 = vst.msk [vmem:[#allocation2 + $0x33] sm:$0x1] %vm358, %v831
    %849 = vst.msk [vmem:[#allocation2 + $0x3b] sm:$0x1] %vm358, %v833
    %851 = vrot.lane.b32.xlu0 %v764, 32
    %v852 = vpop.permute.xlu0 %851
    %854 = vrot.lane.b32.xlu0 %v801, 64
    %v855 = vpop.permute.xlu0 %854
    %v857 = vsel %vm82, %v852, %v855
    %v858 = vpack.c.bf16 %v857, %v857
    %v860 = vsel %vm213, %v858, 0
    %862 = vmatpush.bf16.msra.mxu0 0
    %863 = vmatpush.bf16.msra.mxu0 0
    %864 = vmatpush.bf16.msra.mxu0 0
    %865 = vmatpush.bf16.msra.mxu0 0
    %866 = vmatpush.bf16.msra.mxu0 %v203
    %867 = vmatpush.bf16.msra.mxu0 %v201
    %868 = vmatpush.bf16.msra.mxu0 %v199
    %869 = vmatpush.bf16.msra.mxu0 %v197
    %870 = vmatmul.bf16.gmra.mxu0 %v860
    %v871 = vpop.f32.mrf.mxu0
    %v872 = vadd.f32 %v125, %v871
    %v873 = vpop.f32.mrf.mxu0
    %874 = vdwg.mxu0
    %875 = vmatpush.bf16.msra.mxu0 0
    %876 = vmatpush.bf16.msra.mxu0 0
    %877 = vmatpush.bf16.msra.mxu0 0
    %878 = vmatpush.bf16.msra.mxu0 0
    %879 = vmatpush.bf16.msra.mxu0 %v204
    %880 = vmatpush.bf16.msra.mxu0 %v202
    %881 = vmatpush.bf16.msra.mxu0 %v200
    %882 = vmatpush.bf16.msra.mxu0 %v198
    %883 = vmatmul.bf16.gmra.mxu0 %v860
    %v884 = vpop.f32.mrf.mxu0
    %v885 = vadd.f32 %v171, %v884
    %v886 = vpop.f32.mrf.mxu0
    %887 = vdwg.mxu0
    %v888 = vadd.f32 %v872, %v117
    %v889 = vxor.u32 %v888, 2147483648
    %v890 = vmul.f32 %v889, 1.442695
    %v891 = vpow.pop %v890
    %v892 = vadd.f32 %v891, 1.0
    %v893 = vrcp.pop %v892
    %v894 = vmul.f32 %v892, %v893
    %v895 = vsub.f32 1.0, %v894
    %v896 = vmul.f32 %v893, %v895
    %v897 = vadd.f32 %v893, %v896
    %vm898 = vweird.f32 %v892
    %vm899 = vweird.f32 %v893
    %vm900 = vmor %vm898, %vm899
    %v901 = vsel %vm900, %v893, %v897
    %v902 = vand.u32 2147483647, %v892
    %vm903 = vcmp.eq.f32.partialorder %v902, 8.507059e+37
    %v904 = vand.u32 %v892, 2147483648
    %v905 = vor.u32 1.1754944e-38, %v904
    %v906 = vsel %vm903, %v905, %v901
    %v907 = vmul.f32 1.0, %v906
    %v908 = vtanh.pop %v888
    %v909 = vmul.f32 %v907, %v758
    %911 = vrot.lane.b32.xlu0 %v908, 64
    %v912 = vpop.permute.xlu0 %911
    %v914 = vmul.f32 %v907, %v912
    %916 = vrot.lane.b32.xlu0 %v914, 32
    %v917 = vpop.permute.xlu0 %916
    %v919 = vadd.f32 %v909, %v917
    %v920 = vtanh.pop %v919
    %922 = vrot.lane.b32.xlu0 %v920, 64
    %v923 = vpop.permute.xlu0 %922
    %v925 = vmul.f32 %v907, %v923
    %v926 = vxor.u32 %v885, 2147483648
    %v927 = vmul.f32 %v926, 1.442695
    %v928 = vpow.pop %v927
    %v929 = vadd.f32 %v928, 1.0
    %v930 = vrcp.pop %v929
    %v931 = vmul.f32 %v929, %v930
    %v932 = vsub.f32 1.0, %v931
    %v933 = vmul.f32 %v930, %v932
    %v934 = vadd.f32 %v930, %v933
    %vm935 = vweird.f32 %v929
    %vm936 = vweird.f32 %v930
    %vm937 = vmor %vm935, %vm936
    %v938 = vsel %vm937, %v930, %v934
    %v939 = vand.u32 2147483647, %v929
    %vm940 = vcmp.eq.f32.partialorder %v939, 8.507059e+37
    %v941 = vand.u32 %v929, 2147483648
    %v942 = vor.u32 1.1754944e-38, %v941
    %v943 = vsel %vm940, %v942, %v938
    %v944 = vmul.f32 1.0, %v943
    %v945 = vtanh.pop %v885
    %v946 = vmul.f32 %v944, %v795
    %948 = vrot.lane.b32.xlu0 %v945, 64
    %v949 = vpop.permute.xlu0 %948
    %v951 = vmul.f32 %v944, %v949
    %953 = vrot.lane.b32.xlu0 %v951, 32
    %v954 = vpop.permute.xlu0 %953
    %v956 = vadd.f32 %v946, %v954
    %v957 = vtanh.pop %v956
    %959 = vrot.lane.b32.xlu0 %v957, 64
    %v960 = vpop.permute.xlu0 %959
    %v962 = vmul.f32 %v944, %v960
    %v964 = vrot.slane %v962, 1
    %v965 = vrot.slane %v962, 2
    %v966 = vrot.slane %v962, 3
    %v967 = vrot.slane %v962, 4
    %v968 = vrot.slane %v962, 5
    %v969 = vrot.slane %v962, 6
    %v970 = vrot.slane %v962, 7
    %v971 = vperm.slane %v962, 0
    %v972 = vperm.slane %v964, 0
    %v973 = vperm.slane %v965, 0
    %v974 = vperm.slane %v966, 0
    %v975 = vperm.slane %v967, 0
    %v976 = vperm.slane %v968, 0
    %v977 = vperm.slane %v969, 0
    %v978 = vperm.slane %v970, 0
    %979 = vrot.lane.b32.xlu0 %v971, 32
    %v980 = vpop.permute.xlu0 %979
    %981 = vrot.lane.b32.xlu0 %v972, 32
    %v982 = vpop.permute.xlu0 %981
    %983 = vrot.lane.b32.xlu0 %v973, 32
    %v984 = vpop.permute.xlu0 %983
    %985 = vrot.lane.b32.xlu0 %v974, 32
    %v986 = vpop.permute.xlu0 %985
    %987 = vrot.lane.b32.xlu0 %v975, 32
    %v988 = vpop.permute.xlu0 %987
    %989 = vrot.lane.b32.xlu0 %v976, 32
    %v990 = vpop.permute.xlu0 %989
    %991 = vrot.lane.b32.xlu0 %v977, 32
    %v992 = vpop.permute.xlu0 %991
    %993 = vrot.lane.b32.xlu0 %v978, 32
    %v994 = vpop.permute.xlu0 %993
    %1003 = vst.msk [vmem:[#allocation2 + $0x4] sm:$0x1] %vm358, %v980
    %1004 = vst.msk [vmem:[#allocation2 + $0xc] sm:$0x1] %vm358, %v982
    %1005 = vst.msk [vmem:[#allocation2 + $0x14] sm:$0x1] %vm358, %v984
    %1006 = vst.msk [vmem:[#allocation2 + $0x1c] sm:$0x1] %vm358, %v986
    %1007 = vst.msk [vmem:[#allocation2 + $0x24] sm:$0x1] %vm358, %v988
    %1008 = vst.msk [vmem:[#allocation2 + $0x2c] sm:$0x1] %vm358, %v990
    %1009 = vst.msk [vmem:[#allocation2 + $0x34] sm:$0x1] %vm358, %v992
    %1010 = vst.msk [vmem:[#allocation2 + $0x3c] sm:$0x1] %vm358, %v994
    %1012 = vrot.lane.b32.xlu0 %v925, 32
    %v1013 = vpop.permute.xlu0 %1012
    %1015 = vrot.lane.b32.xlu0 %v962, 64
    %v1016 = vpop.permute.xlu0 %1015
    %v1018 = vsel %vm82, %v1013, %v1016
    %v1019 = vpack.c.bf16 %v1018, %v1018
    %v1021 = vsel %vm213, %v1019, 0
    %1023 = vmatpush.bf16.msra.mxu0 0
    %1024 = vmatpush.bf16.msra.mxu0 0
    %1025 = vmatpush.bf16.msra.mxu0 0
    %1026 = vmatpush.bf16.msra.mxu0 0
    %1027 = vmatpush.bf16.msra.mxu0 %v203
    %1028 = vmatpush.bf16.msra.mxu0 %v201
    %1029 = vmatpush.bf16.msra.mxu0 %v199
    %1030 = vmatpush.bf16.msra.mxu0 %v197
    %1031 = vmatmul.bf16.gmra.mxu0 %v1021
    %v1032 = vpop.f32.mrf.mxu0
    %v1033 = vadd.f32 %v125, %v1032
    %v1034 = vpop.f32.mrf.mxu0
    %1035 = vdwg.mxu0
    %1036 = vmatpush.bf16.msra.mxu0 0
    %1037 = vmatpush.bf16.msra.mxu0 0
    %1038 = vmatpush.bf16.msra.mxu0 0
    %1039 = vmatpush.bf16.msra.mxu0 0
    %1040 = vmatpush.bf16.msra.mxu0 %v204
    %1041 = vmatpush.bf16.msra.mxu0 %v202
    %1042 = vmatpush.bf16.msra.mxu0 %v200
    %1043 = vmatpush.bf16.msra.mxu0 %v198
    %1044 = vmatmul.bf16.gmra.mxu0 %v1021
    %v1045 = vpop.f32.mrf.mxu0
    %v1046 = vadd.f32 %v171, %v1045
    %v1047 = vpop.f32.mrf.mxu0
    %1048 = vdwg.mxu0
    %v1049 = vadd.f32 %v1033, %v120
    %v1050 = vxor.u32 %v1049, 2147483648
    %v1051 = vmul.f32 %v1050, 1.442695
    %v1052 = vpow.pop %v1051
    %v1053 = vadd.f32 %v1052, 1.0
    %v1054 = vrcp.pop %v1053
    %v1055 = vmul.f32 %v1053, %v1054
    %v1056 = vsub.f32 1.0, %v1055
    %v1057 = vmul.f32 %v1054, %v1056
    %v1058 = vadd.f32 %v1054, %v1057
    %vm1059 = vweird.f32 %v1053
    %vm1060 = vweird.f32 %v1054
    %vm1061 = vmor %vm1059, %vm1060
    %v1062 = vsel %vm1061, %v1054, %v1058
    %v1063 = vand.u32 2147483647, %v1053
    %vm1064 = vcmp.eq.f32.partialorder %v1063, 8.507059e+37
    %v1065 = vand.u32 %v1053, 2147483648
    %v1066 = vor.u32 1.1754944e-38, %v1065
    %v1067 = vsel %vm1064, %v1066, %v1062
    %v1068 = vmul.f32 1.0, %v1067
    %v1069 = vtanh.pop %v1049
    %v1070 = vmul.f32 %v1068, %v919
    %1072 = vrot.lane.b32.xlu0 %v1069, 64
    %v1073 = vpop.permute.xlu0 %1072
    %v1075 = vmul.f32 %v1068, %v1073
    %1077 = vrot.lane.b32.xlu0 %v1075, 32
    %v1078 = vpop.permute.xlu0 %1077
    %v1080 = vadd.f32 %v1070, %v1078
    %v1081 = vtanh.pop %v1080
    %1083 = vrot.lane.b32.xlu0 %v1081, 64
    %v1084 = vpop.permute.xlu0 %1083
    %v1086 = vmul.f32 %v1068, %v1084
    %v1087 = vxor.u32 %v1046, 2147483648
    %v1088 = vmul.f32 %v1087, 1.442695
    %v1089 = vpow.pop %v1088
    %v1090 = vadd.f32 %v1089, 1.0
    %v1091 = vrcp.pop %v1090
    %v1092 = vmul.f32 %v1090, %v1091
    %v1093 = vsub.f32 1.0, %v1092
    %v1094 = vmul.f32 %v1091, %v1093
    %v1095 = vadd.f32 %v1091, %v1094
    %vm1096 = vweird.f32 %v1090
    %vm1097 = vweird.f32 %v1091
    %vm1098 = vmor %vm1096, %vm1097
    %v1099 = vsel %vm1098, %v1091, %v1095
    %v1100 = vand.u32 2147483647, %v1090
    %vm1101 = vcmp.eq.f32.partialorder %v1100, 8.507059e+37
    %v1102 = vand.u32 %v1090, 2147483648
    %v1103 = vor.u32 1.1754944e-38, %v1102
    %v1104 = vsel %vm1101, %v1103, %v1099
    %v1105 = vmul.f32 1.0, %v1104
    %v1106 = vtanh.pop %v1046
    %v1107 = vmul.f32 %v1105, %v956
    %1109 = vrot.lane.b32.xlu0 %v1106, 64
    %v1110 = vpop.permute.xlu0 %1109
    %v1112 = vmul.f32 %v1105, %v1110
    %1114 = vrot.lane.b32.xlu0 %v1112, 32
    %v1115 = vpop.permute.xlu0 %1114
    %v1117 = vadd.f32 %v1107, %v1115
    %v1118 = vtanh.pop %v1117
    %1120 = vrot.lane.b32.xlu0 %v1118, 64
    %v1121 = vpop.permute.xlu0 %1120
    %v1123 = vmul.f32 %v1105, %v1121
    %v1125 = vrot.slane %v1123, 1
    %v1126 = vrot.slane %v1123, 2
    %v1127 = vrot.slane %v1123, 3
    %v1128 = vrot.slane %v1123, 4
    %v1129 = vrot.slane %v1123, 5
    %v1130 = vrot.slane %v1123, 6
    %v1131 = vrot.slane %v1123, 7
    %v1132 = vperm.slane %v1123, 0
    %v1133 = vperm.slane %v1125, 0
    %v1134 = vperm.slane %v1126, 0
    %v1135 = vperm.slane %v1127, 0
    %v1136 = vperm.slane %v1128, 0
    %v1137 = vperm.slane %v1129, 0
    %v1138 = vperm.slane %v1130, 0
    %v1139 = vperm.slane %v1131, 0
    %1140 = vrot.lane.b32.xlu0 %v1132, 32
    %v1141 = vpop.permute.xlu0 %1140
    %1142 = vrot.lane.b32.xlu0 %v1133, 32
    %v1143 = vpop.permute.xlu0 %1142
    %1144 = vrot.lane.b32.xlu0 %v1134, 32
    %v1145 = vpop.permute.xlu0 %1144
    %1146 = vrot.lane.b32.xlu0 %v1135, 32
    %v1147 = vpop.permute.xlu0 %1146
    %1148 = vrot.lane.b32.xlu0 %v1136, 32
    %v1149 = vpop.permute.xlu0 %1148
    %1150 = vrot.lane.b32.xlu0 %v1137, 32
    %v1151 = vpop.permute.xlu0 %1150
    %1152 = vrot.lane.b32.xlu0 %v1138, 32
    %v1153 = vpop.permute.xlu0 %1152
    %1154 = vrot.lane.b32.xlu0 %v1139, 32
    %v1155 = vpop.permute.xlu0 %1154
    %1164 = vst.msk [vmem:[#allocation2 + $0x5] sm:$0x1] %vm358, %v1141
    %1165 = vst.msk [vmem:[#allocation2 + $0xd] sm:$0x1] %vm358, %v1143
    %1166 = vst.msk [vmem:[#allocation2 + $0x15] sm:$0x1] %vm358, %v1145
    %1167 = vst.msk [vmem:[#allocation2 + $0x1d] sm:$0x1] %vm358, %v1147
    %1168 = vst.msk [vmem:[#allocation2 + $0x25] sm:$0x1] %vm358, %v1149
    %1169 = vst.msk [vmem:[#allocation2 + $0x2d] sm:$0x1] %vm358, %v1151
    %1170 = vst.msk [vmem:[#allocation2 + $0x35] sm:$0x1] %vm358, %v1153
    %1171 = vst.msk [vmem:[#allocation2 + $0x3d] sm:$0x1] %vm358, %v1155
    %1173 = vrot.lane.b32.xlu0 %v1086, 32
    %v1174 = vpop.permute.xlu0 %1173
    %1176 = vrot.lane.b32.xlu0 %v1123, 64
    %v1177 = vpop.permute.xlu0 %1176
    %v1179 = vsel %vm82, %v1174, %v1177
    %v1180 = vpack.c.bf16 %v1179, %v1179
    %v1182 = vsel %vm213, %v1180, 0
    %1184 = vmatpush.bf16.msra.mxu0 0
    %1185 = vmatpush.bf16.msra.mxu0 0
    %1186 = vmatpush.bf16.msra.mxu0 0
    %1187 = vmatpush.bf16.msra.mxu0 0
    %1188 = vmatpush.bf16.msra.mxu0 %v203
    %1189 = vmatpush.bf16.msra.mxu0 %v201
    %1190 = vmatpush.bf16.msra.mxu0 %v199
    %1191 = vmatpush.bf16.msra.mxu0 %v197
    %1192 = vmatmul.bf16.gmra.mxu0 %v1182
    %v1193 = vpop.f32.mrf.mxu0
    %v1194 = vadd.f32 %v125, %v1193
    %v1195 = vpop.f32.mrf.mxu0
    %1196 = vdwg.mxu0
    %1197 = vmatpush.bf16.msra.mxu0 0
    %1198 = vmatpush.bf16.msra.mxu0 0
    %1199 = vmatpush.bf16.msra.mxu0 0
    %1200 = vmatpush.bf16.msra.mxu0 0
    %1201 = vmatpush.bf16.msra.mxu0 %v204
    %1202 = vmatpush.bf16.msra.mxu0 %v202
    %1203 = vmatpush.bf16.msra.mxu0 %v200
    %1204 = vmatpush.bf16.msra.mxu0 %v198
    %1205 = vmatmul.bf16.gmra.mxu0 %v1182
    %v1206 = vpop.f32.mrf.mxu0
    %v1207 = vadd.f32 %v171, %v1206
    %v1208 = vpop.f32.mrf.mxu0
    %1209 = vdwg.mxu0
    %v1210 = vadd.f32 %v1194, %v122
    %v1211 = vxor.u32 %v1210, 2147483648
    %v1212 = vmul.f32 %v1211, 1.442695
    %v1213 = vpow.pop %v1212
    %v1214 = vadd.f32 %v1213, 1.0
    %v1215 = vrcp.pop %v1214
    %v1216 = vmul.f32 %v1214, %v1215
    %v1217 = vsub.f32 1.0, %v1216
    %v1218 = vmul.f32 %v1215, %v1217
    %v1219 = vadd.f32 %v1215, %v1218
    %vm1220 = vweird.f32 %v1214
    %vm1221 = vweird.f32 %v1215
    %vm1222 = vmor %vm1220, %vm1221
    %v1223 = vsel %vm1222, %v1215, %v1219
    %v1224 = vand.u32 2147483647, %v1214
    %vm1225 = vcmp.eq.f32.partialorder %v1224, 8.507059e+37
    %v1226 = vand.u32 %v1214, 2147483648
    %v1227 = vor.u32 1.1754944e-38, %v1226
    %v1228 = vsel %vm1225, %v1227, %v1223
    %v1229 = vmul.f32 1.0, %v1228
    %v1230 = vtanh.pop %v1210
    %v1231 = vmul.f32 %v1229, %v1080
    %1233 = vrot.lane.b32.xlu0 %v1230, 64
    %v1234 = vpop.permute.xlu0 %1233
    %v1236 = vmul.f32 %v1229, %v1234
    %1238 = vrot.lane.b32.xlu0 %v1236, 32
    %v1239 = vpop.permute.xlu0 %1238
    %v1241 = vadd.f32 %v1231, %v1239
    %v1242 = vtanh.pop %v1241
    %1244 = vrot.lane.b32.xlu0 %v1242, 64
    %v1245 = vpop.permute.xlu0 %1244
    %v1247 = vmul.f32 %v1229, %v1245
    %v1248 = vxor.u32 %v1207, 2147483648
    %v1249 = vmul.f32 %v1248, 1.442695
    %v1250 = vpow.pop %v1249
    %v1251 = vadd.f32 %v1250, 1.0
    %v1252 = vrcp.pop %v1251
    %v1253 = vmul.f32 %v1251, %v1252
    %v1254 = vsub.f32 1.0, %v1253
    %v1255 = vmul.f32 %v1252, %v1254
    %v1256 = vadd.f32 %v1252, %v1255
    %vm1257 = vweird.f32 %v1251
    %vm1258 = vweird.f32 %v1252
    %vm1259 = vmor %vm1257, %vm1258
    %v1260 = vsel %vm1259, %v1252, %v1256
    %v1261 = vand.u32 2147483647, %v1251
    %vm1262 = vcmp.eq.f32.partialorder %v1261, 8.507059e+37
    %v1263 = vand.u32 %v1251, 2147483648
    %v1264 = vor.u32 1.1754944e-38, %v1263
    %v1265 = vsel %vm1262, %v1264, %v1260
    %v1266 = vmul.f32 1.0, %v1265
    %v1267 = vtanh.pop %v1207
    %v1268 = vmul.f32 %v1266, %v1117
    %1270 = vrot.lane.b32.xlu0 %v1267, 64
    %v1271 = vpop.permute.xlu0 %1270
    %v1273 = vmul.f32 %v1266, %v1271
    %1275 = vrot.lane.b32.xlu0 %v1273, 32
    %v1276 = vpop.permute.xlu0 %1275
    %v1278 = vadd.f32 %v1268, %v1276
    %v1279 = vtanh.pop %v1278
    %1281 = vrot.lane.b32.xlu0 %v1279, 64
    %v1282 = vpop.permute.xlu0 %1281
    %v1284 = vmul.f32 %v1266, %v1282
    %v1286 = vrot.slane %v1284, 1
    %v1287 = vrot.slane %v1284, 2
    %v1288 = vrot.slane %v1284, 3
    %v1289 = vrot.slane %v1284, 4
    %v1290 = vrot.slane %v1284, 5
    %v1291 = vrot.slane %v1284, 6
    %v1292 = vrot.slane %v1284, 7
    %v1293 = vperm.slane %v1284, 0
    %v1294 = vperm.slane %v1286, 0
    %v1295 = vperm.slane %v1287, 0
    %v1296 = vperm.slane %v1288, 0
    %v1297 = vperm.slane %v1289, 0
    %v1298 = vperm.slane %v1290, 0
    %v1299 = vperm.slane %v1291, 0
    %v1300 = vperm.slane %v1292, 0
    %1301 = vrot.lane.b32.xlu0 %v1293, 32
    %v1302 = vpop.permute.xlu0 %1301
    %1303 = vrot.lane.b32.xlu0 %v1294, 32
    %v1304 = vpop.permute.xlu0 %1303
    %1305 = vrot.lane.b32.xlu0 %v1295, 32
    %v1306 = vpop.permute.xlu0 %1305
    %1307 = vrot.lane.b32.xlu0 %v1296, 32
    %v1308 = vpop.permute.xlu0 %1307
    %1309 = vrot.lane.b32.xlu0 %v1297, 32
    %v1310 = vpop.permute.xlu0 %1309
    %1311 = vrot.lane.b32.xlu0 %v1298, 32
    %v1312 = vpop.permute.xlu0 %1311
    %1313 = vrot.lane.b32.xlu0 %v1299, 32
    %v1314 = vpop.permute.xlu0 %1313
    %1315 = vrot.lane.b32.xlu0 %v1300, 32
    %v1316 = vpop.permute.xlu0 %1315
    %1325 = vst.msk [vmem:[#allocation2 + $0x6] sm:$0x1] %vm358, %v1302
    %1326 = vst.msk [vmem:[#allocation2 + $0xe] sm:$0x1] %vm358, %v1304
    %1327 = vst.msk [vmem:[#allocation2 + $0x16] sm:$0x1] %vm358, %v1306
    %1328 = vst.msk [vmem:[#allocation2 + $0x1e] sm:$0x1] %vm358, %v1308
    %1329 = vst.msk [vmem:[#allocation2 + $0x26] sm:$0x1] %vm358, %v1310
    %1330 = vst.msk [vmem:[#allocation2 + $0x2e] sm:$0x1] %vm358, %v1312
    %1331 = vst.msk [vmem:[#allocation2 + $0x36] sm:$0x1] %vm358, %v1314
    %1332 = vst.msk [vmem:[#allocation2 + $0x3e] sm:$0x1] %vm358, %v1316
    %1334 = vrot.lane.b32.xlu0 %v1247, 32
    %v1335 = vpop.permute.xlu0 %1334
    %1337 = vrot.lane.b32.xlu0 %v1284, 64
    %v1338 = vpop.permute.xlu0 %1337
    %v1340 = vsel %vm82, %v1335, %v1338
    %v1341 = vpack.c.bf16 %v1340, %v1340
    %v1343 = vsel %vm213, %v1341, 0
    %1345 = vmatpush.bf16.msra.mxu0 0
    %1346 = vmatpush.bf16.msra.mxu0 0
    %1347 = vmatpush.bf16.msra.mxu0 0
    %1348 = vmatpush.bf16.msra.mxu0 0
    %1349 = vmatpush.bf16.msra.mxu0 %v204
    %1350 = vmatpush.bf16.msra.mxu0 %v202
    %1351 = vmatpush.bf16.msra.mxu0 %v200
    %1352 = vmatpush.bf16.msra.mxu0 %v198
    %1353 = vmatmul.bf16.gmra.mxu0 %v1343
    %v1354 = vpop.f32.mrf.mxu0
    %v1355 = vadd.f32 %v171, %v1354
    %v1356 = vpop.f32.mrf.mxu0
    %1357 = vdwg.mxu0
    %v1358 = vxor.u32 %v1355, 2147483648
    %v1359 = vmul.f32 %v1358, 1.442695
    %v1360 = vpow.pop %v1359
    %v1361 = vadd.f32 %v1360, 1.0
    %v1362 = vrcp.pop %v1361
    %v1363 = vmul.f32 %v1361, %v1362
    %v1364 = vsub.f32 1.0, %v1363
    %v1365 = vmul.f32 %v1362, %v1364
    %v1366 = vadd.f32 %v1362, %v1365
    %vm1367 = vweird.f32 %v1361
    %vm1368 = vweird.f32 %v1362
    %vm1369 = vmor %vm1367, %vm1368
    %v1370 = vsel %vm1369, %v1362, %v1366
    %v1371 = vand.u32 2147483647, %v1361
    %vm1372 = vcmp.eq.f32.partialorder %v1371, 8.507059e+37
    %v1373 = vand.u32 %v1361, 2147483648
    %v1374 = vor.u32 1.1754944e-38, %v1373
    %v1375 = vsel %vm1372, %v1374, %v1370
    %v1376 = vmul.f32 1.0, %v1375
    %v1377 = vtanh.pop %v1355
    %v1378 = vmul.f32 %v1376, %v1278
    %1380 = vrot.lane.b32.xlu0 %v1377, 64
    %v1381 = vpop.permute.xlu0 %1380
    %v1383 = vmul.f32 %v1376, %v1381
    %1385 = vrot.lane.b32.xlu0 %v1383, 32
    %v1386 = vpop.permute.xlu0 %1385
    %v1388 = vadd.f32 %v1378, %v1386
    %v1389 = vtanh.pop %v1388
    %1391 = vrot.lane.b32.xlu0 %v1389, 64
    %v1392 = vpop.permute.xlu0 %1391
    %v1394 = vmul.f32 %v1376, %v1392
    %v1396 = vrot.slane %v1394, 1
    %v1397 = vrot.slane %v1394, 2
    %v1398 = vrot.slane %v1394, 3
    %v1399 = vrot.slane %v1394, 4
    %v1400 = vrot.slane %v1394, 5
    %v1401 = vrot.slane %v1394, 6
    %v1402 = vrot.slane %v1394, 7
    %v1403 = vperm.slane %v1394, 0
    %v1404 = vperm.slane %v1396, 0
    %v1405 = vperm.slane %v1397, 0
    %v1406 = vperm.slane %v1398, 0
    %v1407 = vperm.slane %v1399, 0
    %v1408 = vperm.slane %v1400, 0
    %v1409 = vperm.slane %v1401, 0
    %v1410 = vperm.slane %v1402, 0
    %1411 = vrot.lane.b32.xlu0 %v1403, 32
    %v1412 = vpop.permute.xlu0 %1411
    %1413 = vrot.lane.b32.xlu0 %v1404, 32
    %v1414 = vpop.permute.xlu0 %1413
    %1415 = vrot.lane.b32.xlu0 %v1405, 32
    %v1416 = vpop.permute.xlu0 %1415
    %1417 = vrot.lane.b32.xlu0 %v1406, 32
    %v1418 = vpop.permute.xlu0 %1417
    %1419 = vrot.lane.b32.xlu0 %v1407, 32
    %v1420 = vpop.permute.xlu0 %1419
    %1421 = vrot.lane.b32.xlu0 %v1408, 32
    %v1422 = vpop.permute.xlu0 %1421
    %1423 = vrot.lane.b32.xlu0 %v1409, 32
    %v1424 = vpop.permute.xlu0 %1423
    %1425 = vrot.lane.b32.xlu0 %v1410, 32
    %v1426 = vpop.permute.xlu0 %1425
    %1435 = vst.msk [vmem:[#allocation2 + $0x7] sm:$0x1] %vm358, %v1412
    %1436 = vst.msk [vmem:[#allocation2 + $0xf] sm:$0x1] %vm358, %v1414
    %1437 = vst.msk [vmem:[#allocation2 + $0x17] sm:$0x1] %vm358, %v1416
    %1438 = vst.msk [vmem:[#allocation2 + $0x1f] sm:$0x1] %vm358, %v1418
    %1439 = vst.msk [vmem:[#allocation2 + $0x27] sm:$0x1] %vm358, %v1420
    %1440 = vst.msk [vmem:[#allocation2 + $0x2f] sm:$0x1] %vm358, %v1422
    %1441 = vst.msk [vmem:[#allocation2 + $0x37] sm:$0x1] %vm358, %v1424
    %1442 = vst.msk [vmem:[#allocation2 + $0x3f] sm:$0x1] %vm358, %v1426
    %v1443 = vld [vmem:[#allocation2] sm:$0xff]
    %v1444 = vld [vmem:[#allocation2 + $0x8] sm:$0xff]
    %v1445 = vld [vmem:[#allocation2 + $0x10] sm:$0xff]
    %v1446 = vld [vmem:[#allocation2 + $0x18] sm:$0xff]
    %v1447 = vpack.c.bf16 %v1444, %v1443
    %v1448 = vpack.c.bf16 %v1446, %v1445
    %v1449 = vld [vmem:[%s4] sm:$0xf]
    %v1450 = vld [vmem:[%s4 + $0x4] sm:$0xf]
    %v1451 = vld [vmem:[%s4 + $0x8] sm:$0xf]
    %v1452 = vld [vmem:[%s4 + $0xc] sm:$0xf]
    %v1453 = vld [vmem:[%s5] sm:$0x1]
    %v1455 = vperm.slane %v1453, 0
    %v1461 = vunpack.c.l.b16 %v1449
    %v1462 = vunpack.c.l.b16 %v1450
    %v1463 = vunpack.c.l.b16 %v1451
    %v1464 = vunpack.c.l.b16 %v1452
    %v1465 = vpack.c.b16 %v1462, %v1461
    %v1466 = vpack.c.b16 %v1464, %v1463
    %v1470 = vsel %vm82, %v1447, 0
    %v1473 = vsel %vm82, %v1448, 0
    %1475 = vmatpush.bf16.msra.mxu0 0
    %1476 = vmatpush.bf16.msra.mxu0 0
    %1477 = vmatpush.bf16.msra.mxu0 0
    %1478 = vmatpush.bf16.msra.mxu0 0
    %1479 = vmatpush.bf16.msra.mxu0 0
    %1480 = vmatpush.bf16.msra.mxu0 0
    %1481 = vmatpush.bf16.msra.mxu0 %v1466
    %1482 = vmatpush.bf16.msra.mxu0 %v1465
    %1483 = vmatmul.bf16.gmra.mxu0 %v1470
    %v1484 = vpop.f32.mrf.mxu0
    %v1485 = vadd.f32 %v1455, %v1484
    %v1486 = vpop.f32.mrf.mxu0
    %v1487 = vadd.f32 %v1455, %v1486
    %1488 = vmatmul.bf16.gmra.mxu0 %v1473
    %v1489 = vpop.f32.mrf.mxu0
    %v1490 = vadd.f32 %v1455, %v1489
    %v1491 = vpop.f32.mrf.mxu0
    %v1492 = vadd.f32 %v1455, %v1491
    %1493 = vdwg.mxu0
    %1494 = vst.msk [vmem:[#allocation3] sm:$0xff] %vm82, %v1485
    %1495 = vst.msk [vmem:[#allocation3 + $0x8] sm:$0xff] %vm82, %v1487
    %1496 = vst.msk [vmem:[#allocation3 + $0x10] sm:$0xff] %vm82, %v1490
    %1497 = vst.msk [vmem:[#allocation3 + $0x18] sm:$0xff] %vm82, %v1492
    %vm1498 = vcmask 257024
    %1499 = vst.msk [vmem:[#allocation5] sm:$0xf] %vm1498, %v1335
    %1501 = vrot.lane.b32.xlu0 %v1241, 96
    %v1502 = vpop.permute.xlu0 %1501
    %1504 = vst.msk [vmem:[#allocation7] sm:$0xf] %vm1498, %v1502
    %1505 = vrot.lane.b32.xlu0 %v1394, 32
    %v1506 = vpop.permute.xlu0 %1505
    %s1508 = scalar_lea.vmem [#allocation5], 4
    %1509 = vst.msk [vmem:[%s1508] sm:$0xf] %vm1498, %v1506
    %1511 = vrot.lane.b32.xlu0 %v1388, 96
    %v1512 = vpop.permute.xlu0 %1511
    %s1514 = scalar_lea.vmem [#allocation7], 4
    %1515 = vst.msk [vmem:[%s1514] sm:$0xf] %vm1498, %v1512
    // Predicated region
    $region26: #{text_generation_forward.1} parent=1 // pred_check
      _
    $region27: #{text_generation_forward.1} parent=1 // pred_check_branch
      %1517 = sbr.rel (0) target = $region29
    $region28: #{text_generation_forward.1} parent=1 // pred_region
      %1519 = vsyncadd [#allocation4], 0
      %s1520 = sshll.u32 [#allocation3], 4
      %s1521 = int_to_ptr.vmem [resolvable:$true] %s1520
      %s1522 = sshll.u32 %s6, 4
      %s1523 = int_to_ptr.hbm [resolvable:$true] %s1522
      %1528 = dma.vmem_to_hbm [thread:$0]  %s1521, 512, %s1523, [#allocation4], 128, 128, 8
    $region29: #{text_generation_forward.1} parent=1 // pred_fallthru
      _
    // Predicated region
    $region30: #{text_generation_forward.1} parent=1 // pred_check
      _
    $region31: #{text_generation_forward.1} parent=1 // pred_check_branch
      %1530 = sbr.rel (0) target = $region33
    $region32: #{text_generation_forward.1} parent=1 // pred_region
      %1532 = vsyncadd [#allocation6], 0
      %s1533 = sshll.u32 [#allocation5], 4
      %s1534 = int_to_ptr.vmem [resolvable:$true] %s1533
      %s1535 = sshll.u32 %s7, 4
      %s1536 = int_to_ptr.hbm [resolvable:$true] %s1535
      %1541 = dma.vmem_to_hbm [thread:$0]  %s1534, 128, %s1536, [#allocation6], 64, 64, 4
    $region33: #{text_generation_forward.1} parent=1 // pred_fallthru
      _
    // Predicated region
    $region34: #{text_generation_forward.1} parent=1 // pred_check
      _
    $region35: #{text_generation_forward.1} parent=1 // pred_check_branch
      %1543 = sbr.rel (0) target = $region37
    $region36: #{text_generation_forward.1} parent=1 // pred_region
      %1545 = vsyncadd [#allocation6], 0
      %s1546 = sshll.u32 [#allocation7], 4
      %s1547 = int_to_ptr.vmem [resolvable:$true] %s1546
      %s1548 = sshll.u32 %s8, 4
      %s1549 = int_to_ptr.hbm [resolvable:$true] %s1548
      %1554 = dma.vmem_to_hbm [thread:$0]  %s1547, 128, %s1549, [#allocation6], 64, 64, 4
    $region37: #{text_generation_forward.1} parent=1 // pred_fallthru
      _
    // Predicated region
    $region38: #{text_generation_forward.1} parent=1 // pred_check
      _
    $region39: #{text_generation_forward.1} parent=1 // pred_check_branch
      %1556 = sbr.rel (0) target = $region41
    $region40: #{text_generation_forward.1} parent=1 // pred_region
      %1558 = dma.done [#allocation4], 512
    $region41: #{text_generation_forward.1} parent=1 // pred_fallthru
      _
    // Predicated region
    $region42: #{text_generation_forward.1} parent=1 // pred_check
      _
    $region43: #{text_generation_forward.1} parent=1 // pred_check_branch
      %1560 = sbr.rel (0) target = $region45
    $region44: #{text_generation_forward.1} parent=1 // pred_region
      %1562 = dma.done [#allocation6], 128
    $region45: #{text_generation_forward.1} parent=1 // pred_fallthru
      _
    // Predicated region
    $region46: #{text_generation_forward.1} parent=1 // pred_check
      _
    $region47: #{text_generation_forward.1} parent=1 // pred_check_branch
      %1564 = sbr.rel (0) target = $region49
    $region48: #{text_generation_forward.1} parent=1 // pred_region
      %1566 = dma.done [#allocation6], 128
    $region49: #{text_generation_forward.1} parent=1 // pred_fallthru
      _
    %1567 = vsyncpa [#allocation4], 1
    %1568 = vsyncpa [#allocation6], 1

</llo_original>
